<compile_context>
chip_gen: v6e
topology: v6e:2x2x1
jax: 0.10.0
libtpu: 0.0.40
codegen_flags: <defaults>
</compile_context>

<pallas_src>
import functools

import numpy as np
import jax
import jax.numpy as jnp
from jax import lax
from jax.experimental import pallas as pl
from jax.experimental.pallas import tpu as pltpu


def _chain_lstm_kernel(feats_ref, wx_ref, bx_ref, wh_ref, wpx_ref, bpx_ref,
                       h_out_ref, c_out_ref, *, h_dim, t_max, b_blk):
    """One grid step: forward chain recurrence for b_blk independent chains,
    all t_max (padded) time steps, fully unrolled.

    Gate columns are pre-permuted host-side to [i, o, f, r | u]; bh is
    pre-folded into bx (constant per step)."""
    H = h_dim
    feats = feats_ref[...]                                    # [T, B, F]
    f_dim = feats.shape[-1]
    # Merge leading dims (second-minor stays a multiple of 8) -> layout-safe.
    feats_flat = feats.reshape(t_max * b_blk, f_dim)          # [T*B, F]

    wx = wx_ref[...]                                          # [F, 5H] (permuted)
    wh = wh_ref[...]                                          # [H, 5H] (permuted)
    wpx = wpx_ref[...]                                        # [F, H]
    bx = bx_ref[...]                                          # [1, 5H] (= bx + bh)
    bpx = bpx_ref[...]                                        # [1, H]

    # Input-side projections for all chains / all steps: two MXU matmuls.
    xproj = jnp.dot(feats_flat, wx, preferred_element_type=jnp.float32) + bx     # [T*B, 5H]
    pxproj = jnp.dot(feats_flat, wpx, preferred_element_type=jnp.float32) + bpx  # [T*B, H]

    c = jnp.zeros((b_blk, H), jnp.float32)
    h = jnp.zeros((b_blk, H), jnp.float32)
    h_steps = []
    c_steps = []
    for t in range(t_max):                                    # static, fully unrolled
        row0 = t * b_blk                                      # static, sublane-aligned
        gates = xproj[row0:row0 + b_blk, :] + jnp.dot(
            h, wh, preferred_element_type=jnp.float32)        # [B, 5H]
        sg = jax.nn.sigmoid(gates[:, 0:4 * H])                # i,o,f,r in one 128-lane slab
        u = jnp.tanh(gates[:, 4 * H:5 * H])
        i = sg[:, 0 * H:1 * H]
        o = sg[:, 1 * H:2 * H]
        f = sg[:, 2 * H:3 * H]
        r = sg[:, 3 * H:4 * H]
        c = i * u + f * c
        hh = o * jnp.tanh(c)
        px = pxproj[row0:row0 + b_blk, :]
        h = r * hh + (1.0 - r) * px
        h_steps.append(h)
        c_steps.append(c)

    # Lane-dense stores: one [B, T*H] (T*H >= 128) write per output.
    h_out_ref[...] = jnp.concatenate(h_steps, axis=1)
    c_out_ref[...] = jnp.concatenate(c_steps, axis=1)


def chain_lstm_pallas(features_btf, wx_t, bx, wh_t, bh, wpx_t, bpx, h_dim,
                      *, b_blk=8):
    """Run ChainLSTM (forward direction, highway, eval mode) over a batch of
    zero-padded chains in ONE pallas_call.

    features_btf : [num_chains, t_max, feat_dim] padded per-chain child features
    weights pre-transposed to [in, out]; biases 1-D.
    Returns h, c : [num_chains, t_max, h_dim]; rows beyond a chain's true
    length are padding artefacts and must be ignored by the caller."""
    num_chains, t_max, feat_dim = features_btf.shape
    assert num_chains % b_blk == 0, "pad number of chains to a multiple of b_blk"
    H = h_dim

    # Host-side prep: permute gate columns [i,o,f,u,r] -> [i,o,f,r,u] and fold
    # the recurrent bias bh into bx (both constant per step).
    perm = np.concatenate([np.arange(0, 3 * H),       # i, o, f
                           np.arange(4 * H, 5 * H),   # r
                           np.arange(3 * H, 4 * H)])  # u
    wx_p = wx_t[:, perm]
    wh_p = wh_t[:, perm]
    bx_p = (bx + bh)[perm].reshape(1, 5 * H)
    bpx_2d = bpx.reshape(1, H)

    # Time-major packing so each time step's rows are contiguous in the kernel.
    feats_tbf = jnp.transpose(features_btf, (1, 0, 2))        # [t_max, num_chains, F]

    grid = (num_chains // b_blk,)
    kernel = functools.partial(_chain_lstm_kernel, h_dim=H, t_max=t_max,
                               b_blk=b_blk)
    h_flat, c_flat = pl.pallas_call(
        kernel,
        out_shape=(
            jax.ShapeDtypeStruct((num_chains, t_max * H), jnp.float32),
            jax.ShapeDtypeStruct((num_chains, t_max * H), jnp.float32),
        ),
        grid=grid,
        in_specs=[
            pl.BlockSpec((t_max, b_blk, feat_dim), lambda g: (0, g, 0)),
            pl.BlockSpec((feat_dim, 5 * H), lambda g: (0, 0)),
            pl.BlockSpec((1, 5 * H), lambda g: (0, 0)),
            pl.BlockSpec((H, 5 * H), lambda g: (0, 0)),
            pl.BlockSpec((feat_dim, H), lambda g: (0, 0)),
            pl.BlockSpec((1, H), lambda g: (0, 0)),
        ],
        out_specs=(
            pl.BlockSpec((b_blk, t_max * H), lambda g: (g, 0)),
            pl.BlockSpec((b_blk, t_max * H), lambda g: (g, 0)),
        ),
        compiler_params=pltpu.CompilerParams(
            # chain groups are independent -> shard across TCs on v7x megacore
            dimension_semantics=("parallel",),
            # tiny working set; stays far under v7x's smaller VMEM budget
            vmem_limit_bytes=16 * 1024 * 1024,
        ),
    )(feats_tbf, wx_p, bx_p, wh_p, wpx_t, bpx_2d)

    h_out = h_flat.reshape(num_chains, t_max, H)
    c_out = c_flat.reshape(num_chains, t_max, H)
    return h_out, c_out


def chain_lstm_ref(features_btf, wx_t, bx, wh_t, bh, wpx_t, bpx, h_dim):
    """Pure-JAX batched reference mirroring ChainLSTM.node_forward step by step
    (original gate order i,o,f,u,r; bh applied every step)."""
    num_chains, t_max, _ = features_btf.shape
    H = h_dim
    hp = lax.Precision.HIGHEST
    c = jnp.zeros((num_chains, H), jnp.float32)
    h = jnp.zeros((num_chains, H), jnp.float32)
    hs, cs = [], []
    for t in range(t_max):
        x = features_btf[:, t, :]
        gates = (jnp.dot(x, wx_t, precision=hp) + bx
                 + jnp.dot(h, wh_t, precision=hp) + bh)
        i = jax.nn.sigmoid(gates[:, 0 * H:1 * H])
        o = jax.nn.sigmoid(gates[:, 1 * H:2 * H])
        f = jax.nn.sigmoid(gates[:, 2 * H:3 * H])
        u = jnp.tanh(gates[:, 3 * H:4 * H])
        r = jax.nn.sigmoid(gates[:, 4 * H:5 * H])
        c = i * u + f * c
        hh = o * jnp.tanh(c)
        px = jnp.dot(x, wpx_t, precision=hp) + bpx
        h = r * hh + (1.0 - r) * px
        hs.append(h)
        cs.append(c)
    return jnp.stack(hs, axis=1), jnp.stack(cs, axis=1)


if __name__ == "__main__":
    # Small shapes consistent with the module: 32 tree nodes, each with 1..8
    # children (one chain per node), feat_dim=16, h_dim=32, highway on.
    feat_dim, h_dim = 16, 32
    num_split = 5                 # use_highway=True -> i, o, f, u, r
    t_max = 8                     # max children per node
    num_chains = 32               # number of tree nodes (multiple of b_blk)
    b_blk = 8                     # chains per grid step

    key = jax.random.PRNGKey(0)
    k_feat, k_wx, k_wh, k_wpx, k_len = jax.random.split(key, 5)

    # Ragged chain lengths (children per node), 1..t_max.
    lengths = np.asarray(
        jax.device_get(jax.random.randint(k_len, (num_chains,), 1, t_max + 1)),
        dtype=np.int32)

    # Gathering each child's feature row from the global [num_obj, F] matrix is
    # host-side glue; here are the packed, zero-padded per-chain features.
    feats_full = jax.random.normal(k_feat, (num_chains, t_max, feat_dim),
                                   jnp.float32)
    valid = jnp.asarray(np.arange(t_max)[None, :] < lengths[:, None])   # [B, T]
    features_btf = jnp.where(valid[:, :, None], feats_full, 0.0)

    # Deterministic parameters (nn.Linear shapes, stored transposed [in, out]).
    # Biases follow __init__: zeros except ioffuh forget-gate slice [2H:3H] = 1.
    scale = 0.1
    wx_t = scale * jax.random.normal(k_wx, (feat_dim, num_split * h_dim), jnp.float32)
    wh_t = scale * jax.random.normal(k_wh, (h_dim, num_split * h_dim), jnp.float32)
    wpx_t = scale * jax.random.normal(k_wpx, (feat_dim, h_dim), jnp.float32)
    bx = jnp.zeros((num_split * h_dim,), jnp.float32)
    bh = jnp.zeros((num_split * h_dim,), jnp.float32).at[2 * h_dim:3 * h_dim].set(1.0)
    bpx = jnp.zeros((h_dim,), jnp.float32)

    h_out, c_out = chain_lstm_pallas(features_btf, wx_t, bx, wh_t, bh, wpx_t,
                                     bpx, h_dim, b_blk=b_blk)
    jax.block_until_ready((h_out, c_out))

    h_ref, c_ref = chain_lstm_ref(features_btf, wx_t, bx, wh_t, bh, wpx_t, bpx,
                                  h_dim)

    # Compare only the valid (non-padded) steps of every chain.
    m = valid[:, :, None]
    assert jnp.allclose(jnp.where(m, h_out, 0.0), jnp.where(m, h_ref, 0.0),
                        atol=1e-5, rtol=1e-5), "hidden mismatch"
    assert jnp.allclose(jnp.where(m, c_out, 0.0), jnp.where(m, c_ref, 0.0),
                        atol=1e-5, rtol=1e-5), "cell mismatch"

    print("KERNEL_OK")
</pallas_src>

<mosaic_0001>
module attributes {stable_mosaic.version = 11 : i64} {
  func.func @_chain_lstm_kernel(%arg0: i32, %arg1: memref<8x8x16xf32, #tpu.memory_space<vmem>>, %arg2: memref<16x160xf32, #tpu.memory_space<vmem>>, %arg3: memref<1x160xf32, #tpu.memory_space<vmem>>, %arg4: memref<32x160xf32, #tpu.memory_space<vmem>>, %arg5: memref<16x32xf32, #tpu.memory_space<vmem>>, %arg6: memref<1x32xf32, #tpu.memory_space<vmem>>, %arg7: memref<8x256xf32, #tpu.memory_space<vmem>>, %arg8: memref<8x256xf32, #tpu.memory_space<vmem>>) attributes {dimension_semantics = [#tpu.dimension_semantics<parallel>], iteration_bounds = array<i64: 4>, scalar_prefetch = 0 : i64, scratch_operands = 0 : i64, tpu.core_type = #tpu.core_type<tc>, window_params = [{transform_indices = @transform_0, window_bounds = array<i64: 8, 8, 16>}, {pipeline_mode = #tpu.pipeline_mode<synchronous>, transform_indices = @transform_1, window_bounds = array<i64: 16, 160>}, {pipeline_mode = #tpu.pipeline_mode<synchronous>, transform_indices = @transform_2, window_bounds = array<i64: 1, 160>}, {pipeline_mode = #tpu.pipeline_mode<synchronous>, transform_indices = @transform_3, window_bounds = array<i64: 32, 160>}, {pipeline_mode = #tpu.pipeline_mode<synchronous>, transform_indices = @transform_4, window_bounds = array<i64: 16, 32>}, {pipeline_mode = #tpu.pipeline_mode<synchronous>, transform_indices = @transform_5, window_bounds = array<i64: 1, 32>}, {transform_indices = @transform_6, window_bounds = array<i64: 8, 256>}, {transform_indices = @transform_7, window_bounds = array<i64: 8, 256>}]} {
    %c0 = arith.constant 0 : index
    %c0_0 = arith.constant 0 : index
    %c0_1 = arith.constant 0 : index
    %0 = vector.load %arg1[%c0, %c0_0, %c0_1] : memref<8x8x16xf32, #tpu.memory_space<vmem>>, vector<8x8x16xf32>
    %1 = vector.shape_cast %0 : vector<8x8x16xf32> to vector<64x16xf32>
    %c0_2 = arith.constant 0 : index
    %c0_3 = arith.constant 0 : index
    %2 = vector.load %arg2[%c0_2, %c0_3] : memref<16x160xf32, #tpu.memory_space<vmem>>, vector<16x160xf32>
    %c0_4 = arith.constant 0 : index
    %c0_5 = arith.constant 0 : index
    %3 = vector.load %arg4[%c0_4, %c0_5] : memref<32x160xf32, #tpu.memory_space<vmem>>, vector<32x160xf32>
    %c0_6 = arith.constant 0 : index
    %c0_7 = arith.constant 0 : index
    %4 = vector.load %arg5[%c0_6, %c0_7] : memref<16x32xf32, #tpu.memory_space<vmem>>, vector<16x32xf32>
    %c0_8 = arith.constant 0 : index
    %c0_9 = arith.constant 0 : index
    %5 = vector.load %arg3[%c0_8, %c0_9] : memref<1x160xf32, #tpu.memory_space<vmem>>, vector<1x160xf32>
    %c0_10 = arith.constant 0 : index
    %c0_11 = arith.constant 0 : index
    %6 = vector.load %arg6[%c0_10, %c0_11] : memref<1x32xf32, #tpu.memory_space<vmem>>, vector<1x32xf32>
    %cst = arith.constant dense<0.000000e+00> : vector<64x160xf32>
    %7 = tpu.matmul %1, %2, %cst {dimension_numbers = #tpu.dot_dimension_numbers<[1], [0], [0], [1], [0, 0, 1, 1], [], []>} : vector<64x16xf32>, vector<16x160xf32>, vector<64x160xf32> -> vector<64x160xf32>
    %8 = vector.broadcast %5 : vector<1x160xf32> to vector<64x160xf32>
    %9 = arith.addf %7, %8 : vector<64x160xf32>
    %cst_12 = arith.constant dense<0.000000e+00> : vector<64x32xf32>
    %10 = tpu.matmul %1, %4, %cst_12 {dimension_numbers = #tpu.dot_dimension_numbers<[1], [0], [0], [1], [0, 0, 1, 1], [], []>} : vector<64x16xf32>, vector<16x32xf32>, vector<64x32xf32> -> vector<64x32xf32>
    %11 = vector.broadcast %6 : vector<1x32xf32> to vector<64x32xf32>
    %12 = arith.addf %10, %11 : vector<64x32xf32>
    %cst_13 = arith.constant 0.000000e+00 : f32
    %13 = vector.broadcast %cst_13 : f32 to vector<8x32xf32>
    %cst_14 = arith.constant 0.000000e+00 : f32
    %14 = vector.broadcast %cst_14 : f32 to vector<8x32xf32>
    %15 = vector.extract_strided_slice %9 {offsets = [0, 0], sizes = [8, 160], strides = [1, 1]} : vector<64x160xf32> to vector<8x160xf32>
    %cst_15 = arith.constant dense<0.000000e+00> : vector<8x160xf32>
    %16 = tpu.matmul %14, %3, %cst_15 {dimension_numbers = #tpu.dot_dimension_numbers<[1], [0], [0], [1], [0, 0, 1, 1], [], []>} : vector<8x32xf32>, vector<32x160xf32>, vector<8x160xf32> -> vector<8x160xf32>
    %17 = arith.addf %15, %16 : vector<8x160xf32>
    %18 = vector.extract_strided_slice %17 {offsets = [0, 0], sizes = [8, 128], strides = [1, 1]} : vector<8x160xf32> to vector<8x128xf32>
    %19 = arith.negf %18 : vector<8x128xf32>
    %20 = math.exp %19 : vector<8x128xf32>
    %cst_16 = arith.constant 1.000000e+00 : f32
    %21 = vector.broadcast %cst_16 : f32 to vector<8x128xf32>
    %22 = arith.addf %21, %20 : vector<8x128xf32>
    %23 = arith.divf %21, %22 : vector<8x128xf32>
    %24 = vector.extract_strided_slice %17 {offsets = [0, 128], sizes = [8, 32], strides = [1, 1]} : vector<8x160xf32> to vector<8x32xf32>
    %25 = math.tanh %24 : vector<8x32xf32>
    %26 = vector.extract_strided_slice %23 {offsets = [0, 0], sizes = [8, 32], strides = [1, 1]} : vector<8x128xf32> to vector<8x32xf32>
    %27 = vector.extract_strided_slice %23 {offsets = [0, 32], sizes = [8, 32], strides = [1, 1]} : vector<8x128xf32> to vector<8x32xf32>
    %28 = vector.extract_strided_slice %23 {offsets = [0, 64], sizes = [8, 32], strides = [1, 1]} : vector<8x128xf32> to vector<8x32xf32>
    %29 = vector.extract_strided_slice %23 {offsets = [0, 96], sizes = [8, 32], strides = [1, 1]} : vector<8x128xf32> to vector<8x32xf32>
    %30 = arith.mulf %26, %25 : vector<8x32xf32>
    %31 = arith.mulf %28, %13 : vector<8x32xf32>
    %32 = arith.addf %30, %31 : vector<8x32xf32>
    %33 = math.tanh %32 : vector<8x32xf32>
    %34 = arith.mulf %27, %33 : vector<8x32xf32>
    %35 = vector.extract_strided_slice %12 {offsets = [0, 0], sizes = [8, 32], strides = [1, 1]} : vector<64x32xf32> to vector<8x32xf32>
    %36 = arith.mulf %29, %34 : vector<8x32xf32>
    %cst_17 = arith.constant 1.000000e+00 : f32
    %37 = vector.broadcast %cst_17 : f32 to vector<8x32xf32>
    %38 = arith.subf %37, %29 : vector<8x32xf32>
    %39 = arith.mulf %38, %35 : vector<8x32xf32>
    %40 = arith.addf %36, %39 : vector<8x32xf32>
    %41 = vector.extract_strided_slice %9 {offsets = [8, 0], sizes = [8, 160], strides = [1, 1]} : vector<64x160xf32> to vector<8x160xf32>
    %cst_18 = arith.constant dense<0.000000e+00> : vector<8x160xf32>
    %42 = tpu.matmul %40, %3, %cst_18 {dimension_numbers = #tpu.dot_dimension_numbers<[1], [0], [0], [1], [0, 0, 1, 1], [], []>} : vector<8x32xf32>, vector<32x160xf32>, vector<8x160xf32> -> vector<8x160xf32>
    %43 = arith.addf %41, %42 : vector<8x160xf32>
    %44 = vector.extract_strided_slice %43 {offsets = [0, 0], sizes = [8, 128], strides = [1, 1]} : vector<8x160xf32> to vector<8x128xf32>
    %45 = arith.negf %44 : vector<8x128xf32>
    %46 = math.exp %45 : vector<8x128xf32>
    %cst_19 = arith.constant 1.000000e+00 : f32
    %47 = vector.broadcast %cst_19 : f32 to vector<8x128xf32>
    %48 = arith.addf %47, %46 : vector<8x128xf32>
    %49 = arith.divf %47, %48 : vector<8x128xf32>
    %50 = vector.extract_strided_slice %43 {offsets = [0, 128], sizes = [8, 32], strides = [1, 1]} : vector<8x160xf32> to vector<8x32xf32>
    %51 = math.tanh %50 : vector<8x32xf32>
    %52 = vector.extract_strided_slice %49 {offsets = [0, 0], sizes = [8, 32], strides = [1, 1]} : vector<8x128xf32> to vector<8x32xf32>
    %53 = vector.extract_strided_slice %49 {offsets = [0, 32], sizes = [8, 32], strides = [1, 1]} : vector<8x128xf32> to vector<8x32xf32>
    %54 = vector.extract_strided_slice %49 {offsets = [0, 64], sizes = [8, 32], strides = [1, 1]} : vector<8x128xf32> to vector<8x32xf32>
    %55 = vector.extract_strided_slice %49 {offsets = [0, 96], sizes = [8, 32], strides = [1, 1]} : vector<8x128xf32> to vector<8x32xf32>
    %56 = arith.mulf %52, %51 : vector<8x32xf32>
    %57 = arith.mulf %54, %32 : vector<8x32xf32>
    %58 = arith.addf %56, %57 : vector<8x32xf32>
    %59 = math.tanh %58 : vector<8x32xf32>
    %60 = arith.mulf %53, %59 : vector<8x32xf32>
    %61 = vector.extract_strided_slice %12 {offsets = [8, 0], sizes = [8, 32], strides = [1, 1]} : vector<64x32xf32> to vector<8x32xf32>
    %62 = arith.mulf %55, %60 : vector<8x32xf32>
    %cst_20 = arith.constant 1.000000e+00 : f32
    %63 = vector.broadcast %cst_20 : f32 to vector<8x32xf32>
    %64 = arith.subf %63, %55 : vector<8x32xf32>
    %65 = arith.mulf %64, %61 : vector<8x32xf32>
    %66 = arith.addf %62, %65 : vector<8x32xf32>
    %67 = vector.extract_strided_slice %9 {offsets = [16, 0], sizes = [8, 160], strides = [1, 1]} : vector<64x160xf32> to vector<8x160xf32>
    %cst_21 = arith.constant dense<0.000000e+00> : vector<8x160xf32>
    %68 = tpu.matmul %66, %3, %cst_21 {dimension_numbers = #tpu.dot_dimension_numbers<[1], [0], [0], [1], [0, 0, 1, 1], [], []>} : vector<8x32xf32>, vector<32x160xf32>, vector<8x160xf32> -> vector<8x160xf32>
    %69 = arith.addf %67, %68 : vector<8x160xf32>
    %70 = vector.extract_strided_slice %69 {offsets = [0, 0], sizes = [8, 128], strides = [1, 1]} : vector<8x160xf32> to vector<8x128xf32>
    %71 = arith.negf %70 : vector<8x128xf32>
    %72 = math.exp %71 : vector<8x128xf32>
    %cst_22 = arith.constant 1.000000e+00 : f32
    %73 = vector.broadcast %cst_22 : f32 to vector<8x128xf32>
    %74 = arith.addf %73, %72 : vector<8x128xf32>
    %75 = arith.divf %73, %74 : vector<8x128xf32>
    %76 = vector.extract_strided_slice %69 {offsets = [0, 128], sizes = [8, 32], strides = [1, 1]} : vector<8x160xf32> to vector<8x32xf32>
    %77 = math.tanh %76 : vector<8x32xf32>
    %78 = vector.extract_strided_slice %75 {offsets = [0, 0], sizes = [8, 32], strides = [1, 1]} : vector<8x128xf32> to vector<8x32xf32>
    %79 = vector.extract_strided_slice %75 {offsets = [0, 32], sizes = [8, 32], strides = [1, 1]} : vector<8x128xf32> to vector<8x32xf32>
    %80 = vector.extract_strided_slice %75 {offsets = [0, 64], sizes = [8, 32], strides = [1, 1]} : vector<8x128xf32> to vector<8x32xf32>
    %81 = vector.extract_strided_slice %75 {offsets = [0, 96], sizes = [8, 32], strides = [1, 1]} : vector<8x128xf32> to vector<8x32xf32>
    %82 = arith.mulf %78, %77 : vector<8x32xf32>
    %83 = arith.mulf %80, %58 : vector<8x32xf32>
    %84 = arith.addf %82, %83 : vector<8x32xf32>
    %85 = math.tanh %84 : vector<8x32xf32>
    %86 = arith.mulf %79, %85 : vector<8x32xf32>
    %87 = vector.extract_strided_slice %12 {offsets = [16, 0], sizes = [8, 32], strides = [1, 1]} : vector<64x32xf32> to vector<8x32xf32>
    %88 = arith.mulf %81, %86 : vector<8x32xf32>
    %cst_23 = arith.constant 1.000000e+00 : f32
    %89 = vector.broadcast %cst_23 : f32 to vector<8x32xf32>
    %90 = arith.subf %89, %81 : vector<8x32xf32>
    %91 = arith.mulf %90, %87 : vector<8x32xf32>
    %92 = arith.addf %88, %91 : vector<8x32xf32>
    %93 = vector.extract_strided_slice %9 {offsets = [24, 0], sizes = [8, 160], strides = [1, 1]} : vector<64x160xf32> to vector<8x160xf32>
    %cst_24 = arith.constant dense<0.000000e+00> : vector<8x160xf32>
    %94 = tpu.matmul %92, %3, %cst_24 {dimension_numbers = #tpu.dot_dimension_numbers<[1], [0], [0], [1], [0, 0, 1, 1], [], []>} : vector<8x32xf32>, vector<32x160xf32>, vector<8x160xf32> -> vector<8x160xf32>
    %95 = arith.addf %93, %94 : vector<8x160xf32>
    %96 = vector.extract_strided_slice %95 {offsets = [0, 0], sizes = [8, 128], strides = [1, 1]} : vector<8x160xf32> to vector<8x128xf32>
    %97 = arith.negf %96 : vector<8x128xf32>
    %98 = math.exp %97 : vector<8x128xf32>
    %cst_25 = arith.constant 1.000000e+00 : f32
    %99 = vector.broadcast %cst_25 : f32 to vector<8x128xf32>
    %100 = arith.addf %99, %98 : vector<8x128xf32>
    %101 = arith.divf %99, %100 : vector<8x128xf32>
    %102 = vector.extract_strided_slice %95 {offsets = [0, 128], sizes = [8, 32], strides = [1, 1]} : vector<8x160xf32> to vector<8x32xf32>
    %103 = math.tanh %102 : vector<8x32xf32>
    %104 = vector.extract_strided_slice %101 {offsets = [0, 0], sizes = [8, 32], strides = [1, 1]} : vector<8x128xf32> to vector<8x32xf32>
    %105 = vector.extract_strided_slice %101 {offsets = [0, 32], sizes = [8, 32], strides = [1, 1]} : vector<8x128xf32> to vector<8x32xf32>
    %106 = vector.extract_strided_slice %101 {offsets = [0, 64], sizes = [8, 32], strides = [1, 1]} : vector<8x128xf32> to vector<8x32xf32>
    %107 = vector.extract_strided_slice %101 {offsets = [0, 96], sizes = [8, 32], strides = [1, 1]} : vector<8x128xf32> to vector<8x32xf32>
    %108 = arith.mulf %104, %103 : vector<8x32xf32>
    %109 = arith.mulf %106, %84 : vector<8x32xf32>
    %110 = arith.addf %108, %109 : vector<8x32xf32>
    %111 = math.tanh %110 : vector<8x32xf32>
    %112 = arith.mulf %105, %111 : vector<8x32xf32>
    %113 = vector.extract_strided_slice %12 {offsets = [24, 0], sizes = [8, 32], strides = [1, 1]} : vector<64x32xf32> to vector<8x32xf32>
    %114 = arith.mulf %107, %112 : vector<8x32xf32>
    %cst_26 = arith.constant 1.000000e+00 : f32
    %115 = vector.broadcast %cst_26 : f32 to vector<8x32xf32>
    %116 = arith.subf %115, %107 : vector<8x32xf32>
    %117 = arith.mulf %116, %113 : vector<8x32xf32>
    %118 = arith.addf %114, %117 : vector<8x32xf32>
    %119 = vector.extract_strided_slice %9 {offsets = [32, 0], sizes = [8, 160], strides = [1, 1]} : vector<64x160xf32> to vector<8x160xf32>
    %cst_27 = arith.constant dense<0.000000e+00> : vector<8x160xf32>
    %120 = tpu.matmul %118, %3, %cst_27 {dimension_numbers = #tpu.dot_dimension_numbers<[1], [0], [0], [1], [0, 0, 1, 1], [], []>} : vector<8x32xf32>, vector<32x160xf32>, vector<8x160xf32> -> vector<8x160xf32>
    %121 = arith.addf %119, %120 : vector<8x160xf32>
    %122 = vector.extract_strided_slice %121 {offsets = [0, 0], sizes = [8, 128], strides = [1, 1]} : vector<8x160xf32> to vector<8x128xf32>
    %123 = arith.negf %122 : vector<8x128xf32>
    %124 = math.exp %123 : vector<8x128xf32>
    %cst_28 = arith.constant 1.000000e+00 : f32
    %125 = vector.broadcast %cst_28 : f32 to vector<8x128xf32>
    %126 = arith.addf %125, %124 : vector<8x128xf32>
    %127 = arith.divf %125, %126 : vector<8x128xf32>
    %128 = vector.extract_strided_slice %121 {offsets = [0, 128], sizes = [8, 32], strides = [1, 1]} : vector<8x160xf32> to vector<8x32xf32>
    %129 = math.tanh %128 : vector<8x32xf32>
    %130 = vector.extract_strided_slice %127 {offsets = [0, 0], sizes = [8, 32], strides = [1, 1]} : vector<8x128xf32> to vector<8x32xf32>
    %131 = vector.extract_strided_slice %127 {offsets = [0, 32], sizes = [8, 32], strides = [1, 1]} : vector<8x128xf32> to vector<8x32xf32>
    %132 = vector.extract_strided_slice %127 {offsets = [0, 64], sizes = [8, 32], strides = [1, 1]} : vector<8x128xf32> to vector<8x32xf32>
    %133 = vector.extract_strided_slice %127 {offsets = [0, 96], sizes = [8, 32], strides = [1, 1]} : vector<8x128xf32> to vector<8x32xf32>
    %134 = arith.mulf %130, %129 : vector<8x32xf32>
    %135 = arith.mulf %132, %110 : vector<8x32xf32>
    %136 = arith.addf %134, %135 : vector<8x32xf32>
    %137 = math.tanh %136 : vector<8x32xf32>
    %138 = arith.mulf %131, %137 : vector<8x32xf32>
    %139 = vector.extract_strided_slice %12 {offsets = [32, 0], sizes = [8, 32], strides = [1, 1]} : vector<64x32xf32> to vector<8x32xf32>
    %140 = arith.mulf %133, %138 : vector<8x32xf32>
    %cst_29 = arith.constant 1.000000e+00 : f32
    %141 = vector.broadcast %cst_29 : f32 to vector<8x32xf32>
    %142 = arith.subf %141, %133 : vector<8x32xf32>
    %143 = arith.mulf %142, %139 : vector<8x32xf32>
    %144 = arith.addf %140, %143 : vector<8x32xf32>
    %145 = vector.extract_strided_slice %9 {offsets = [40, 0], sizes = [8, 160], strides = [1, 1]} : vector<64x160xf32> to vector<8x160xf32>
    %cst_30 = arith.constant dense<0.000000e+00> : vector<8x160xf32>
    %146 = tpu.matmul %144, %3, %cst_30 {dimension_numbers = #tpu.dot_dimension_numbers<[1], [0], [0], [1], [0, 0, 1, 1], [], []>} : vector<8x32xf32>, vector<32x160xf32>, vector<8x160xf32> -> vector<8x160xf32>
    %147 = arith.addf %145, %146 : vector<8x160xf32>
    %148 = vector.extract_strided_slice %147 {offsets = [0, 0], sizes = [8, 128], strides = [1, 1]} : vector<8x160xf32> to vector<8x128xf32>
    %149 = arith.negf %148 : vector<8x128xf32>
    %150 = math.exp %149 : vector<8x128xf32>
    %cst_31 = arith.constant 1.000000e+00 : f32
    %151 = vector.broadcast %cst_31 : f32 to vector<8x128xf32>
    %152 = arith.addf %151, %150 : vector<8x128xf32>
    %153 = arith.divf %151, %152 : vector<8x128xf32>
    %154 = vector.extract_strided_slice %147 {offsets = [0, 128], sizes = [8, 32], strides = [1, 1]} : vector<8x160xf32> to vector<8x32xf32>
    %155 = math.tanh %154 : vector<8x32xf32>
    %156 = vector.extract_strided_slice %153 {offsets = [0, 0], sizes = [8, 32], strides = [1, 1]} : vector<8x128xf32> to vector<8x32xf32>
    %157 = vector.extract_strided_slice %153 {offsets = [0, 32], sizes = [8, 32], strides = [1, 1]} : vector<8x128xf32> to vector<8x32xf32>
    %158 = vector.extract_strided_slice %153 {offsets = [0, 64], sizes = [8, 32], strides = [1, 1]} : vector<8x128xf32> to vector<8x32xf32>
    %159 = vector.extract_strided_slice %153 {offsets = [0, 96], sizes = [8, 32], strides = [1, 1]} : vector<8x128xf32> to vector<8x32xf32>
    %160 = arith.mulf %156, %155 : vector<8x32xf32>
    %161 = arith.mulf %158, %136 : vector<8x32xf32>
    %162 = arith.addf %160, %161 : vector<8x32xf32>
    %163 = math.tanh %162 : vector<8x32xf32>
    %164 = arith.mulf %157, %163 : vector<8x32xf32>
    %165 = vector.extract_strided_slice %12 {offsets = [40, 0], sizes = [8, 32], strides = [1, 1]} : vector<64x32xf32> to vector<8x32xf32>
    %166 = arith.mulf %159, %164 : vector<8x32xf32>
    %cst_32 = arith.constant 1.000000e+00 : f32
    %167 = vector.broadcast %cst_32 : f32 to vector<8x32xf32>
    %168 = arith.subf %167, %159 : vector<8x32xf32>
    %169 = arith.mulf %168, %165 : vector<8x32xf32>
    %170 = arith.addf %166, %169 : vector<8x32xf32>
    %171 = vector.extract_strided_slice %9 {offsets = [48, 0], sizes = [8, 160], strides = [1, 1]} : vector<64x160xf32> to vector<8x160xf32>
    %cst_33 = arith.constant dense<0.000000e+00> : vector<8x160xf32>
    %172 = tpu.matmul %170, %3, %cst_33 {dimension_numbers = #tpu.dot_dimension_numbers<[1], [0], [0], [1], [0, 0, 1, 1], [], []>} : vector<8x32xf32>, vector<32x160xf32>, vector<8x160xf32> -> vector<8x160xf32>
    %173 = arith.addf %171, %172 : vector<8x160xf32>
    %174 = vector.extract_strided_slice %173 {offsets = [0, 0], sizes = [8, 128], strides = [1, 1]} : vector<8x160xf32> to vector<8x128xf32>
    %175 = arith.negf %174 : vector<8x128xf32>
    %176 = math.exp %175 : vector<8x128xf32>
    %cst_34 = arith.constant 1.000000e+00 : f32
    %177 = vector.broadcast %cst_34 : f32 to vector<8x128xf32>
    %178 = arith.addf %177, %176 : vector<8x128xf32>
    %179 = arith.divf %177, %178 : vector<8x128xf32>
    %180 = vector.extract_strided_slice %173 {offsets = [0, 128], sizes = [8, 32], strides = [1, 1]} : vector<8x160xf32> to vector<8x32xf32>
    %181 = math.tanh %180 : vector<8x32xf32>
    %182 = vector.extract_strided_slice %179 {offsets = [0, 0], sizes = [8, 32], strides = [1, 1]} : vector<8x128xf32> to vector<8x32xf32>
    %183 = vector.extract_strided_slice %179 {offsets = [0, 32], sizes = [8, 32], strides = [1, 1]} : vector<8x128xf32> to vector<8x32xf32>
    %184 = vector.extract_strided_slice %179 {offsets = [0, 64], sizes = [8, 32], strides = [1, 1]} : vector<8x128xf32> to vector<8x32xf32>
    %185 = vector.extract_strided_slice %179 {offsets = [0, 96], sizes = [8, 32], strides = [1, 1]} : vector<8x128xf32> to vector<8x32xf32>
    %186 = arith.mulf %182, %181 : vector<8x32xf32>
    %187 = arith.mulf %184, %162 : vector<8x32xf32>
    %188 = arith.addf %186, %187 : vector<8x32xf32>
    %189 = math.tanh %188 : vector<8x32xf32>
    %190 = arith.mulf %183, %189 : vector<8x32xf32>
    %191 = vector.extract_strided_slice %12 {offsets = [48, 0], sizes = [8, 32], strides = [1, 1]} : vector<64x32xf32> to vector<8x32xf32>
    %192 = arith.mulf %185, %190 : vector<8x32xf32>
    %cst_35 = arith.constant 1.000000e+00 : f32
    %193 = vector.broadcast %cst_35 : f32 to vector<8x32xf32>
    %194 = arith.subf %193, %185 : vector<8x32xf32>
    %195 = arith.mulf %194, %191 : vector<8x32xf32>
    %196 = arith.addf %192, %195 : vector<8x32xf32>
    %197 = vector.extract_strided_slice %9 {offsets = [56, 0], sizes = [8, 160], strides = [1, 1]} : vector<64x160xf32> to vector<8x160xf32>
    %cst_36 = arith.constant dense<0.000000e+00> : vector<8x160xf32>
    %198 = tpu.matmul %196, %3, %cst_36 {dimension_numbers = #tpu.dot_dimension_numbers<[1], [0], [0], [1], [0, 0, 1, 1], [], []>} : vector<8x32xf32>, vector<32x160xf32>, vector<8x160xf32> -> vector<8x160xf32>
    %199 = arith.addf %197, %198 : vector<8x160xf32>
    %200 = vector.extract_strided_slice %199 {offsets = [0, 0], sizes = [8, 128], strides = [1, 1]} : vector<8x160xf32> to vector<8x128xf32>
    %201 = arith.negf %200 : vector<8x128xf32>
    %202 = math.exp %201 : vector<8x128xf32>
    %cst_37 = arith.constant 1.000000e+00 : f32
    %203 = vector.broadcast %cst_37 : f32 to vector<8x128xf32>
    %204 = arith.addf %203, %202 : vector<8x128xf32>
    %205 = arith.divf %203, %204 : vector<8x128xf32>
    %206 = vector.extract_strided_slice %199 {offsets = [0, 128], sizes = [8, 32], strides = [1, 1]} : vector<8x160xf32> to vector<8x32xf32>
    %207 = math.tanh %206 : vector<8x32xf32>
    %208 = vector.extract_strided_slice %205 {offsets = [0, 0], sizes = [8, 32], strides = [1, 1]} : vector<8x128xf32> to vector<8x32xf32>
    %209 = vector.extract_strided_slice %205 {offsets = [0, 32], sizes = [8, 32], strides = [1, 1]} : vector<8x128xf32> to vector<8x32xf32>
    %210 = vector.extract_strided_slice %205 {offsets = [0, 64], sizes = [8, 32], strides = [1, 1]} : vector<8x128xf32> to vector<8x32xf32>
    %211 = vector.extract_strided_slice %205 {offsets = [0, 96], sizes = [8, 32], strides = [1, 1]} : vector<8x128xf32> to vector<8x32xf32>
    %212 = arith.mulf %208, %207 : vector<8x32xf32>
    %213 = arith.mulf %210, %188 : vector<8x32xf32>
    %214 = arith.addf %212, %213 : vector<8x32xf32>
    %215 = math.tanh %214 : vector<8x32xf32>
    %216 = arith.mulf %209, %215 : vector<8x32xf32>
    %217 = vector.extract_strided_slice %12 {offsets = [56, 0], sizes = [8, 32], strides = [1, 1]} : vector<64x32xf32> to vector<8x32xf32>
    %218 = arith.mulf %211, %216 : vector<8x32xf32>
    %cst_38 = arith.constant 1.000000e+00 : f32
    %219 = vector.broadcast %cst_38 : f32 to vector<8x32xf32>
    %220 = arith.subf %219, %211 : vector<8x32xf32>
    %221 = arith.mulf %220, %217 : vector<8x32xf32>
    %222 = arith.addf %218, %221 : vector<8x32xf32>
    %223 = tpu.concatenate %40, %66, %92, %118, %144, %170, %196, %222 in 1 : vector<8x32xf32>, vector<8x32xf32>, vector<8x32xf32>, vector<8x32xf32>, vector<8x32xf32>, vector<8x32xf32>, vector<8x32xf32>, vector<8x32xf32> -> vector<8x256xf32>
    %c0_39 = arith.constant 0 : index
    %c0_40 = arith.constant 0 : index
    %224 = vector.load %arg7[%c0_39, %c0_40] : memref<8x256xf32, #tpu.memory_space<vmem>>, vector<8x256xf32>
    tpu.vector_store %arg7[%c0_39, %c0_40], %223 {strides = array<i32>} : memref<8x256xf32, #tpu.memory_space<vmem>>, vector<8x256xf32>,
    %225 = tpu.concatenate %32, %58, %84, %110, %136, %162, %188, %214 in 1 : vector<8x32xf32>, vector<8x32xf32>, vector<8x32xf32>, vector<8x32xf32>, vector<8x32xf32>, vector<8x32xf32>, vector<8x32xf32>, vector<8x32xf32> -> vector<8x256xf32>
    %c0_41 = arith.constant 0 : index
    %c0_42 = arith.constant 0 : index
    %226 = vector.load %arg8[%c0_41, %c0_42] : memref<8x256xf32, #tpu.memory_space<vmem>>, vector<8x256xf32>
    tpu.vector_store %arg8[%c0_41, %c0_42], %225 {strides = array<i32>} : memref<8x256xf32, #tpu.memory_space<vmem>>, vector<8x256xf32>,
    return
  }
  func.func @transform_0(%arg0: i32) -> (i32, i32, i32) {
    %c0_i32 = arith.constant 0 : i32
    %c0_i32_0 = arith.constant 0 : i32
    %c0_i32_1 = arith.constant 0 : i32
    return %c0_i32, %arg0, %c0_i32_0 : i32, i32, i32
  }
  func.func @transform_1(%arg0: i32) -> (i32, i32) {
    %c0_i32 = arith.constant 0 : i32
    %c0_i32_0 = arith.constant 0 : i32
    %c0_i32_1 = arith.constant 0 : i32
    return %c0_i32, %c0_i32_0 : i32, i32
  }
  func.func @transform_2(%arg0: i32) -> (i32, i32) {
    %c0_i32 = arith.constant 0 : i32
    %c0_i32_0 = arith.constant 0 : i32
    %c0_i32_1 = arith.constant 0 : i32
    return %c0_i32, %c0_i32_0 : i32, i32
  }
  func.func @transform_3(%arg0: i32) -> (i32, i32) {
    %c0_i32 = arith.constant 0 : i32
    %c0_i32_0 = arith.constant 0 : i32
    %c0_i32_1 = arith.constant 0 : i32
    return %c0_i32, %c0_i32_0 : i32, i32
  }
  func.func @transform_4(%arg0: i32) -> (i32, i32) {
    %c0_i32 = arith.constant 0 : i32
    %c0_i32_0 = arith.constant 0 : i32
    %c0_i32_1 = arith.constant 0 : i32
    return %c0_i32, %c0_i32_0 : i32, i32
  }
  func.func @transform_5(%arg0: i32) -> (i32, i32) {
    %c0_i32 = arith.constant 0 : i32
    %c0_i32_0 = arith.constant 0 : i32
    %c0_i32_1 = arith.constant 0 : i32
    return %c0_i32, %c0_i32_0 : i32, i32
  }
  func.func @transform_6(%arg0: i32) -> (i32, i32) {
    %c0_i32 = arith.constant 0 : i32
    %c0_i32_0 = arith.constant 0 : i32
    return %arg0, %c0_i32 : i32, i32
  }
  func.func @transform_7(%arg0: i32) -> (i32, i32) {
    %c0_i32 = arith.constant 0 : i32
    %c0_i32_0 = arith.constant 0 : i32
    return %arg0, %c0_i32 : i32, i32
  }
}

</mosaic_0001>

<llo_original>
// kernel: tpu_custom_call.1
$region0: #{tpu_custom_call.1}
  #allocation0 [shape = 'u32[]', space=smem, size = 0x4, offset = 0x4, fixed_abs, tag = 'smem constant byte address 0x4 - core index']
  #allocation1 [shape = 'u32[144,128]{1,0:T(1,128)}', space=vmem, size = 0x12000, scoped, tag = 'internal scratch']
  %s0 = inlined_call_operand.vmem [shape: f32[8,32,16], index: 0, kind: input, shape index: {}]
  %s1 = inlined_call_operand.vmem [shape: f32[16,160], index: 1, kind: input, shape index: {}]
  %s2 = inlined_call_operand.vmem [shape: f32[1,160], index: 2, kind: input, shape index: {}]
  %s3 = inlined_call_operand.vmem [shape: f32[32,160], index: 3, kind: input, shape index: {}]
  %s4 = inlined_call_operand.vmem [shape: f32[16,32], index: 4, kind: input, shape index: {}]
  %s5 = inlined_call_operand.vmem [shape: f32[1,32], index: 5, kind: input, shape index: {}]
  %s6 = inlined_call_operand.hbm [shape: f32[32,256], index: 6, kind: output, shape index: {0}]
  %s7 = inlined_call_operand.hbm [shape: f32[32,256], index: 7, kind: output, shape index: {1}]
  %8 = xla_tuple %s6, %s7
  %s9 = sld [smem:[#allocation0]]
  $region103: #{tpu_custom_call.1} parent=0
    _
  %s11 = ssub.s32 1, %s9
  %s12 = scalar_select 0, %s11, %s9
  $region1: #{tpu_custom_call.1} parent=0
    #allocation2 [shape = 'u8[65536]{0}', space=vmem, size = 0x10000, scoped, tag = 'input window, operand 0']
    #allocation3 [shape = 'u8[16384]{0}', space=vmem, size = 0x4000, scoped, tag = 'output window, operand 0']
    #allocation4 [shape = 's32[2]{0}', space=sflag, size = 0x8, scoped, tag = 'scoped memory for tpu_custom_call.1']
    #allocation5 [shape = 'u8[16384]{0}', space=vmem, size = 0x4000, scoped, tag = 'output window, operand 1']
    #allocation6 [shape = 's32[2]{0}', space=sflag, size = 0x8, scoped, tag = 'scoped memory for tpu_custom_call.1']
    %13 = vsyncpa [#allocation4], 0
    %s14 = scalar_lea.sflag [#allocation4], 1
    %15 = vsyncpa %s14, 0
    %16 = vsyncpa [#allocation6], 0
    %s17 = scalar_lea.sflag [#allocation6], 1
    %18 = vsyncpa %s17, 0
    loop: start=0, step=1, limit=6
    $region2: #{tpu_custom_call.1} parent=1 // loop_pre_header
      _
    $region3: #{tpu_custom_call.1} parent=1 // loop_header
      %s20 = sphi 0, %s24
      %p21 = scmp.ge.s32.totalorder %s20, 6
      %s30 = sphi 0, %s32
      %s33 = sphi 0, %s30
      %s34 = sphi 0, %s33
      %s50 = sphi 0, %s34
      %s54 = sphi 0, %s54
      %s56 = sphi 0, %s54
      %s57 = sphi 0, %s56
      %s71 = sphi 0, %s57
      %s75 = sphi 0, %s75
      %s77 = sphi 0, %s75
      %s78 = sphi 0, %s77
      %s92 = sphi 0, %s78
      %s96 = sphi 0, %s96
      %s98 = sphi 0, %s96
      %s99 = sphi 0, %s98
      %s113 = sphi 0, %s99
      %s117 = sphi 0, %s117
      %s119 = sphi 0, %s117
      %s120 = sphi 0, %s119
      %s134 = sphi 0, %s120
      %s138 = sphi 0, %s138
      %s140 = sphi 0, %s138
      %s141 = sphi 0, %s140
      %s155 = sphi 0, %s141
      %s161 = sphi 0, %s163
      %s164 = sphi 0, %s161
      %s165 = sphi 0, %s164
      %s181 = sphi 0, %s165
      %s187 = sphi 0, %s189
      %s190 = sphi 0, %s187
      %s191 = sphi 0, %s190
      %s207 = sphi 0, %s191
    $region4: #{tpu_custom_call.1} parent=1 // loop_header_branch
      %23 = sbr.rel (%p21) target = $region8
    $region5: #{tpu_custom_call.1} parent=1 // loop_body
      %s25 = ssub.s32 %s20, 1
      %s26 = ssub.s32 %s20, 2
      %s27 = sadd.s32 %s20, 1
      %s28 = ssub.s32 %s20, %s27
      %p29 = scmp.eq.s32.totalorder %s28, 0
      %s31 = sadd.s32 %s30, 1
      %s32 = scalar_select %p29, %s30, %s31
      %p35 = pneg %p29
      %p36 = scmp.eq.s32.totalorder %s20, 3
      %p37 = por %p35, %p36
      %p38 = scmp.ne.s32.totalorder %s30, %s33
      %p39 = scmp.eq.s32.totalorder %s20, 0
      %p40 = por %p38, %p39
      %p41 = scmp.ne.s32.totalorder %s30, %s33
      %p42 = scmp.eq.s32.totalorder %s25, 3
      %p43 = por %p41, %p42
      %p44 = scmp.ne.s32.totalorder %s33, %s34
      %p45 = scmp.eq.s32.totalorder %s25, 0
      %p46 = por %p44, %p45
      %p47 = scmp.ne.s32.totalorder %s33, %s34
      %p48 = scmp.eq.s32.totalorder %s26, 3
      %p49 = por %p47, %p48
      %p51 = scmp.ne.s32.totalorder %s34, %s50
      %p52 = scmp.eq.s32.totalorder %s26, 0
      %p53 = por %p51, %p52
      %s55 = sadd.s32 %s54, 1
      %p58 = scmp.eq.s32.totalorder %s20, 3
      %p59 = scmp.ne.s32.totalorder %s54, %s56
      %p60 = scmp.eq.s32.totalorder %s20, 0
      %p61 = por %p59, %p60
      %p62 = scmp.ne.s32.totalorder %s54, %s56
      %p63 = scmp.eq.s32.totalorder %s25, 3
      %p64 = por %p62, %p63
      %p65 = scmp.ne.s32.totalorder %s56, %s57
      %p66 = scmp.eq.s32.totalorder %s25, 0
      %p67 = por %p65, %p66
      %p68 = scmp.ne.s32.totalorder %s56, %s57
      %p69 = scmp.eq.s32.totalorder %s26, 3
      %p70 = por %p68, %p69
      %p72 = scmp.ne.s32.totalorder %s57, %s71
      %p73 = scmp.eq.s32.totalorder %s26, 0
      %p74 = por %p72, %p73
      %s76 = sadd.s32 %s75, 1
      %p79 = scmp.eq.s32.totalorder %s20, 3
      %p80 = scmp.ne.s32.totalorder %s75, %s77
      %p81 = scmp.eq.s32.totalorder %s20, 0
      %p82 = por %p80, %p81
      %p83 = scmp.ne.s32.totalorder %s75, %s77
      %p84 = scmp.eq.s32.totalorder %s25, 3
      %p85 = por %p83, %p84
      %p86 = scmp.ne.s32.totalorder %s77, %s78
      %p87 = scmp.eq.s32.totalorder %s25, 0
      %p88 = por %p86, %p87
      %p89 = scmp.ne.s32.totalorder %s77, %s78
      %p90 = scmp.eq.s32.totalorder %s26, 3
      %p91 = por %p89, %p90
      %p93 = scmp.ne.s32.totalorder %s78, %s92
      %p94 = scmp.eq.s32.totalorder %s26, 0
      %p95 = por %p93, %p94
      %s97 = sadd.s32 %s96, 1
      %p100 = scmp.eq.s32.totalorder %s20, 3
      %p101 = scmp.ne.s32.totalorder %s96, %s98
      %p102 = scmp.eq.s32.totalorder %s20, 0
      %p103 = por %p101, %p102
      %p104 = scmp.ne.s32.totalorder %s96, %s98
      %p105 = scmp.eq.s32.totalorder %s25, 3
      %p106 = por %p104, %p105
      %p107 = scmp.ne.s32.totalorder %s98, %s99
      %p108 = scmp.eq.s32.totalorder %s25, 0
      %p109 = por %p107, %p108
      %p110 = scmp.ne.s32.totalorder %s98, %s99
      %p111 = scmp.eq.s32.totalorder %s26, 3
      %p112 = por %p110, %p111
      %p114 = scmp.ne.s32.totalorder %s99, %s113
      %p115 = scmp.eq.s32.totalorder %s26, 0
      %p116 = por %p114, %p115
      %s118 = sadd.s32 %s117, 1
      %p121 = scmp.eq.s32.totalorder %s20, 3
      %p122 = scmp.ne.s32.totalorder %s117, %s119
      %p123 = scmp.eq.s32.totalorder %s20, 0
      %p124 = por %p122, %p123
      %p125 = scmp.ne.s32.totalorder %s117, %s119
      %p126 = scmp.eq.s32.totalorder %s25, 3
      %p127 = por %p125, %p126
      %p128 = scmp.ne.s32.totalorder %s119, %s120
      %p129 = scmp.eq.s32.totalorder %s25, 0
      %p130 = por %p128, %p129
      %p131 = scmp.ne.s32.totalorder %s119, %s120
      %p132 = scmp.eq.s32.totalorder %s26, 3
      %p133 = por %p131, %p132
      %p135 = scmp.ne.s32.totalorder %s120, %s134
      %p136 = scmp.eq.s32.totalorder %s26, 0
      %p137 = por %p135, %p136
      %s139 = sadd.s32 %s138, 1
      %p142 = scmp.eq.s32.totalorder %s20, 3
      %p143 = scmp.ne.s32.totalorder %s138, %s140
      %p144 = scmp.eq.s32.totalorder %s20, 0
      %p145 = por %p143, %p144
      %p146 = scmp.ne.s32.totalorder %s138, %s140
      %p147 = scmp.eq.s32.totalorder %s25, 3
      %p148 = por %p146, %p147
      %p149 = scmp.ne.s32.totalorder %s140, %s141
      %p150 = scmp.eq.s32.totalorder %s25, 0
      %p151 = por %p149, %p150
      %p152 = scmp.ne.s32.totalorder %s140, %s141
      %p153 = scmp.eq.s32.totalorder %s26, 3
      %p154 = por %p152, %p153
      %p156 = scmp.ne.s32.totalorder %s141, %s155
      %p157 = scmp.eq.s32.totalorder %s26, 0
      %p158 = por %p156, %p157
      %s159 = ssub.s32 %s20, %s27
      %p160 = scmp.eq.s32.totalorder %s159, 0
      %s162 = sadd.s32 %s161, 1
      %s163 = scalar_select %p160, %s161, %s162
      %p166 = pneg %p160
      %p167 = scmp.eq.s32.totalorder %s20, 3
      %p168 = por %p166, %p167
      %p169 = scmp.ne.s32.totalorder %s161, %s164
      %p170 = scmp.eq.s32.totalorder %s20, 0
      %p171 = por %p169, %p170
      %p172 = scmp.ne.s32.totalorder %s161, %s164
      %p173 = scmp.eq.s32.totalorder %s25, 3
      %p174 = por %p172, %p173
      %p175 = scmp.ne.s32.totalorder %s164, %s165
      %p176 = scmp.eq.s32.totalorder %s25, 0
      %p177 = por %p175, %p176
      %p178 = scmp.ne.s32.totalorder %s164, %s165
      %p179 = scmp.eq.s32.totalorder %s26, 3
      %p180 = por %p178, %p179
      %p182 = scmp.ne.s32.totalorder %s165, %s181
      %p183 = scmp.eq.s32.totalorder %s26, 0
      %p184 = por %p182, %p183
      %s185 = ssub.s32 %s20, %s27
      %p186 = scmp.eq.s32.totalorder %s185, 0
      %s188 = sadd.s32 %s187, 1
      %s189 = scalar_select %p186, %s187, %s188
      %p192 = pneg %p186
      %p193 = scmp.eq.s32.totalorder %s20, 3
      %p194 = por %p192, %p193
      %p195 = scmp.ne.s32.totalorder %s187, %s190
      %p196 = scmp.eq.s32.totalorder %s20, 0
      %p197 = por %p195, %p196
      %p198 = scmp.ne.s32.totalorder %s187, %s190
      %p199 = scmp.eq.s32.totalorder %s25, 3
      %p200 = por %p198, %p199
      %p201 = scmp.ne.s32.totalorder %s190, %s191
      %p202 = scmp.eq.s32.totalorder %s25, 0
      %p203 = por %p201, %p202
      %p204 = scmp.ne.s32.totalorder %s190, %s191
      %p205 = scmp.eq.s32.totalorder %s26, 3
      %p206 = por %p204, %p205
      %p208 = scmp.ne.s32.totalorder %s191, %s207
      %p209 = scmp.eq.s32.totalorder %s26, 0
      %p210 = por %p208, %p209
      %p211 = scmp.le.s32.totalorder 1, %s20
      %p212 = scmp.lt.s32.totalorder %s20, 5
      %p213 = pnand %p211, %p212
      %p214 = pneg %p213
      // Predicated region
      $region9: #{tpu_custom_call.1} parent=5 // pred_check
        _
      $region10: #{tpu_custom_call.1} parent=5 // pred_check_branch
        %216 = sbr.rel (%p213) target = $region12
      $region11: #{tpu_custom_call.1} parent=5 // pred_region
        %s217 = ssub.s32 %s20, 1
        // Predicated region
        $region13: #{tpu_custom_call.1} parent=11 // pred_check
          %p218 = pneg %p67
        $region14: #{tpu_custom_call.1} parent=11 // pred_check_branch
          %220 = sbr.rel (%p218) target = $region16
        $region15: #{tpu_custom_call.1} parent=11 // pred_region
          _
        $region16: #{tpu_custom_call.1} parent=11 // pred_fallthru
          _
        // Predicated region
        $region17: #{tpu_custom_call.1} parent=11 // pred_check
          %p221 = pneg %p88
        $region18: #{tpu_custom_call.1} parent=11 // pred_check_branch
          %223 = sbr.rel (%p221) target = $region20
        $region19: #{tpu_custom_call.1} parent=11 // pred_region
          _
        $region20: #{tpu_custom_call.1} parent=11 // pred_fallthru
          _
        // Predicated region
        $region21: #{tpu_custom_call.1} parent=11 // pred_check
          %p224 = pneg %p109
        $region22: #{tpu_custom_call.1} parent=11 // pred_check_branch
          %226 = sbr.rel (%p224) target = $region24
        $region23: #{tpu_custom_call.1} parent=11 // pred_region
          _
        $region24: #{tpu_custom_call.1} parent=11 // pred_fallthru
          _
        // Predicated region
        $region25: #{tpu_custom_call.1} parent=11 // pred_check
          %p227 = pneg %p130
        $region26: #{tpu_custom_call.1} parent=11 // pred_check_branch
          %229 = sbr.rel (%p227) target = $region28
        $region27: #{tpu_custom_call.1} parent=11 // pred_region
          _
        $region28: #{tpu_custom_call.1} parent=11 // pred_fallthru
          _
        // Predicated region
        $region29: #{tpu_custom_call.1} parent=11 // pred_check
          %p230 = pneg %p151
        $region30: #{tpu_custom_call.1} parent=11 // pred_check_branch
          %232 = sbr.rel (%p230) target = $region32
        $region31: #{tpu_custom_call.1} parent=11 // pred_region
          _
        $region32: #{tpu_custom_call.1} parent=11 // pred_fallthru
          _
      $region12: #{tpu_custom_call.1} parent=5 // pred_fallthru
        _
      %p233 = scmp.lt.s32.totalorder %s20, 4
      // Predicated region
      $region33: #{tpu_custom_call.1} parent=5 // pred_check
        %p234 = pneg %p233
      $region34: #{tpu_custom_call.1} parent=5 // pred_check_branch
        %236 = sbr.rel (%p234) target = $region36
      $region35: #{tpu_custom_call.1} parent=5 // pred_region
        // Predicated region
        $region37: #{tpu_custom_call.1} parent=35 // pred_check
          %p237 = pneg %p40
        $region38: #{tpu_custom_call.1} parent=35 // pred_check_branch
          %239 = sbr.rel (%p237) target = $region40
        $region39: #{tpu_custom_call.1} parent=35 // pred_region
          %s240 = sand.u32 %s30, 1
          %s241 = sand.u32 %s30, 1
          %s242 = smul.addr %s241, 64
          %s243 = scalar_lea.vmem [#allocation2], %s242
          %s244 = smul.addr %s20, 8
          %s245 = scalar_lea.vmem %s0, %s244
          // Predicated region
          $region41: #{tpu_custom_call.1} parent=39 // pred_check
            _
          $region42: #{tpu_custom_call.1} parent=39 // pred_check_branch
            %247 = sbr.rel (0) target = $region44
          $region43: #{tpu_custom_call.1} parent=39 // pred_region
            // Predicated region
            $region45: #{tpu_custom_call.1} parent=43 // pred_check
              _
            $region46: #{tpu_custom_call.1} parent=43 // pred_check_branch
              %249 = sbr.rel (0) target = $region48
            $region47: #{tpu_custom_call.1} parent=43 // pred_region
              // Predicated region
              $region60: #{tpu_custom_call.1} parent=47 // pred_check
                _
              $region61: #{tpu_custom_call.1} parent=47 // pred_check_branch
                %279 = sbr.rel (0) target = $region63
              $region62: #{tpu_custom_call.1} parent=47 // pred_region
                loop: start=0, step=1, limit=1
                $region64: #{tpu_custom_call.1} parent=62 // loop_pre_header
                  _
                $region65: #{tpu_custom_call.1} parent=62 // loop_header
                  %s281 = sphi 0, %s285
                  %p282 = scmp.ge.s32.totalorder %s281, 1
                  %s286 = sphi %s245, %s245
                  %s287 = sphi %s243, %s243
                $region66: #{tpu_custom_call.1} parent=62 // loop_header_branch
                  %284 = sbr.rel (%p282) target = $region70
                $region67: #{tpu_custom_call.1} parent=62 // loop_body
                  %v288 = vld [vmem:[%s286] sm:$0xff]
                  %289 = vst [vmem:[%s287] sm:$0xff] %v288
                  %v290 = vld [vmem:[%s286 + $0x20] sm:$0xff]
                  %291 = vst [vmem:[%s287 + $0x8] sm:$0xff] %v290
                  %v292 = vld [vmem:[%s286 + $0x40] sm:$0xff]
                  %293 = vst [vmem:[%s287 + $0x10] sm:$0xff] %v292
                  %v294 = vld [vmem:[%s286 + $0x60] sm:$0xff]
                  %295 = vst [vmem:[%s287 + $0x18] sm:$0xff] %v294
                  %v296 = vld [vmem:[%s286 + $0x80] sm:$0xff]
                  %297 = vst [vmem:[%s287 + $0x20] sm:$0xff] %v296
                  %v298 = vld [vmem:[%s286 + $0xa0] sm:$0xff]
                  %299 = vst [vmem:[%s287 + $0x28] sm:$0xff] %v298
                  %v300 = vld [vmem:[%s286 + $0xc0] sm:$0xff]
                  %301 = vst [vmem:[%s287 + $0x30] sm:$0xff] %v300
                  %v302 = vld [vmem:[%s286 + $0xe0] sm:$0xff]
                  %303 = vst [vmem:[%s287 + $0x38] sm:$0xff] %v302
                $region68: #{tpu_custom_call.1} parent=62 // loop_footer
                  %s285 = sadd.s32 1, %s281
                $region69: #{tpu_custom_call.1} parent=62 // loop_footer_branch
                  %280 = sbr.rel target = $region65
                $region70: #{tpu_custom_call.1} parent=62 // loop_exit
                  _
              $region63: #{tpu_custom_call.1} parent=47 // pred_fallthru
                _
              // Predicated region
              $region71: #{tpu_custom_call.1} parent=47 // pred_check
                _
              $region72: #{tpu_custom_call.1} parent=47 // pred_check_branch
                %305 = sbr.rel target = $region74
              $region73: #{tpu_custom_call.1} parent=47 // pred_region
                _
              $region74: #{tpu_custom_call.1} parent=47 // pred_fallthru
                _
            $region48: #{tpu_custom_call.1} parent=43 // pred_fallthru
              _
            // Predicated region
            $region49: #{tpu_custom_call.1} parent=43 // pred_check
              _
            $region50: #{tpu_custom_call.1} parent=43 // pred_check_branch
              %251 = sbr.rel target = $region52
            $region51: #{tpu_custom_call.1} parent=43 // pred_region
              %s253 = ssub.s32 256, 1
              loop: start=0, step=1, limit=1
              $region53: #{tpu_custom_call.1} parent=51 // loop_pre_header
                _
              $region54: #{tpu_custom_call.1} parent=51 // loop_header
                %s255 = sphi 0, %s259
                %p256 = scmp.ge.s32.totalorder %s255, 1
                %s260 = sphi %s245, %s245
                %s261 = sphi %s243, %s243
              $region55: #{tpu_custom_call.1} parent=51 // loop_header_branch
                %258 = sbr.rel (%p256) target = $region59
              $region56: #{tpu_custom_call.1} parent=51 // loop_body
                %v262 = vld [vmem:[%s260] sm:%s253]
                %263 = vst [vmem:[%s261] sm:%s253] %v262
                %v264 = vld [vmem:[%s260 + $0x20] sm:%s253]
                %265 = vst [vmem:[%s261 + $0x8] sm:%s253] %v264
                %v266 = vld [vmem:[%s260 + $0x40] sm:%s253]
                %267 = vst [vmem:[%s261 + $0x10] sm:%s253] %v266
                %v268 = vld [vmem:[%s260 + $0x60] sm:%s253]
                %269 = vst [vmem:[%s261 + $0x18] sm:%s253] %v268
                %v270 = vld [vmem:[%s260 + $0x80] sm:%s253]
                %271 = vst [vmem:[%s261 + $0x20] sm:%s253] %v270
                %v272 = vld [vmem:[%s260 + $0xa0] sm:%s253]
                %273 = vst [vmem:[%s261 + $0x28] sm:%s253] %v272
                %v274 = vld [vmem:[%s260 + $0xc0] sm:%s253]
                %275 = vst [vmem:[%s261 + $0x30] sm:%s253] %v274
                %v276 = vld [vmem:[%s260 + $0xe0] sm:%s253]
                %277 = vst [vmem:[%s261 + $0x38] sm:%s253] %v276
              $region57: #{tpu_custom_call.1} parent=51 // loop_footer
                %s259 = sadd.s32 1, %s255
              $region58: #{tpu_custom_call.1} parent=51 // loop_footer_branch
                %254 = sbr.rel target = $region54
              $region59: #{tpu_custom_call.1} parent=51 // loop_exit
                _
            $region52: #{tpu_custom_call.1} parent=43 // pred_fallthru
              _
          $region44: #{tpu_custom_call.1} parent=39 // pred_fallthru
            _
          %306 = vnop
        $region40: #{tpu_custom_call.1} parent=35 // pred_fallthru
          _
      $region36: #{tpu_custom_call.1} parent=5 // pred_fallthru
        _
      %p307 = scmp.le.s32.totalorder 1, %s20
      %p308 = scmp.lt.s32.totalorder %s20, 5
      %p309 = pnand %p307, %p308
      %p310 = pneg %p309
      // Predicated region
      $region75: #{tpu_custom_call.1} parent=5 // pred_check
        _
      $region76: #{tpu_custom_call.1} parent=5 // pred_check_branch
        %312 = sbr.rel (%p309) target = $region78
      $region77: #{tpu_custom_call.1} parent=5 // pred_region
        %s313 = ssub.s32 %s20, 1
        %s314 = sand.u32 %s33, 1
        %s315 = sand.u32 %s33, 1
        %s316 = smul.addr %s315, 64
        %s317 = scalar_lea.vmem [#allocation2], %s316
        // Predicated region
        $region79: #{tpu_custom_call.1} parent=77 // pred_check
          %p318 = pneg %p46
        $region80: #{tpu_custom_call.1} parent=77 // pred_check_branch
          %320 = sbr.rel (%p318) target = $region82
        $region81: #{tpu_custom_call.1} parent=77 // pred_region
          _
        $region82: #{tpu_custom_call.1} parent=77 // pred_fallthru
          _
        %s321 = sand.u32 %s33, 1
        %s322 = sand.u32 %s33, 1
        %s323 = smul.addr %s322, 64
        %s324 = scalar_lea.vmem [#allocation2], %s323
        %p325 = pneg %p46
        %p326 = pneg %p43
        %p327 = pneg %p67
        %p328 = pneg %p64
        %p329 = pneg %p88
        %p330 = pneg %p85
        %p331 = pneg %p109
        %p332 = pneg %p106
        %p333 = pneg %p130
        %p334 = pneg %p127
        %p335 = pneg %p151
        %p336 = pneg %p148
        %p337 = pneg %p177
        %p338 = pneg %p174
        %s339 = sand.u32 %s164, 1
        %s340 = scalar_lea.sflag [#allocation4], %s339
        %s341 = sand.u32 %s164, 1
        %s342 = smul.addr %s341, 16
        %s343 = scalar_lea.vmem [#allocation3], %s342
        %p344 = pneg %p203
        %p345 = pneg %p200
        %s346 = sand.u32 %s190, 1
        %s347 = scalar_lea.sflag [#allocation6], %s346
        %s348 = sand.u32 %s190, 1
        %s349 = smul.addr %s348, 16
        %s350 = scalar_lea.vmem [#allocation5], %s349
        %v351 = vld [vmem:[%s317] sm:$0xff]
        %v352 = vld [vmem:[%s317 + $0x8] sm:$0xff]
        %v353 = vld [vmem:[%s317 + $0x10] sm:$0xff]
        %v354 = vld [vmem:[%s317 + $0x18] sm:$0xff]
        %v355 = vld [vmem:[%s317 + $0x20] sm:$0xff]
        %v356 = vld [vmem:[%s317 + $0x28] sm:$0xff]
        %v357 = vld [vmem:[%s317 + $0x30] sm:$0xff]
        %v358 = vld [vmem:[%s317 + $0x38] sm:$0xff]
        %v359 = vld [vmem:[%s1] sm:$0xff]
        %v360 = vld [vmem:[%s1 + $0x8] sm:$0xff]
        %v361 = vld [vmem:[%s1 + $0x10] sm:$0xff]
        %v362 = vld [vmem:[%s1 + $0x18] sm:$0xff]
        %v363 = vld [vmem:[%s3] sm:$0xff]
        %v364 = vld [vmem:[%s3 + $0x8] sm:$0xff]
        %v365 = vld [vmem:[%s3 + $0x10] sm:$0xff]
        %v366 = vld [vmem:[%s3 + $0x18] sm:$0xff]
        %v367 = vld [vmem:[%s3 + $0x20] sm:$0xff]
        %v368 = vld [vmem:[%s3 + $0x28] sm:$0xff]
        %v369 = vld [vmem:[%s3 + $0x30] sm:$0xff]
        %v370 = vld [vmem:[%s3 + $0x38] sm:$0xff]
        %v371 = vld [vmem:[%s4] sm:$0xff]
        %v372 = vld [vmem:[%s4 + $0x8] sm:$0xff]
        %v373 = vld [vmem:[%s2] sm:$0x3]
        %v374 = vld [vmem:[%s5] sm:$0x1]
        %v376 = vlaneseq
        %v377 = vshrl.u32 %v376, 7
        %v378 = vsub.s32 0, %v377
        %v379 = vrot.slane %v373, %v378
        %v380 = vlaneseq
        %v381 = vshrl.u32 %v380, 7
        %v382 = vsub.s32 1, %v381
        %v383 = vrot.slane %v373, %v382
        %vm386 = vcmask 130048
        %v388 = vsel %vm386, %v351, 0
        %v391 = vsel %vm386, %v352, 0
        %v394 = vsel %vm386, %v353, 0
        %v397 = vsel %vm386, %v354, 0
        %v400 = vsel %vm386, %v355, 0
        %v403 = vsel %vm386, %v356, 0
        %v406 = vsel %vm386, %v357, 0
        %v409 = vsel %vm386, %v358, 0
        %411 = vmatprep.subr.mxu0 0.0
        %412 = vmatpush1.msra.mxu0 0.0
        %413 = vmatprep.subr.mxu0 0.0
        %414 = vmatpush1.msra.mxu0 0.0
        %415 = vmatprep.subr.mxu0 0.0
        %416 = vmatpush1.msra.mxu0 0.0
        %417 = vmatprep.subr.mxu0 0.0
        %418 = vmatpush1.msra.mxu0 0.0
        %419 = vmatprep.subr.mxu0 0.0
        %420 = vmatpush1.msra.mxu0 0.0
        %421 = vmatprep.subr.mxu0 0.0
        %422 = vmatpush1.msra.mxu0 0.0
        %423 = vmatprep.subr.mxu0 0.0
        %424 = vmatpush1.msra.mxu0 0.0
        %425 = vmatprep.subr.mxu0 0.0
        %426 = vmatpush1.msra.mxu0 0.0
        %427 = vmatprep.subr.mxu0 0.0
        %428 = vmatpush1.msra.mxu0 0.0
        %429 = vmatprep.subr.mxu0 0.0
        %430 = vmatpush1.msra.mxu0 0.0
        %431 = vmatprep.subr.mxu0 0.0
        %432 = vmatpush1.msra.mxu0 0.0
        %433 = vmatprep.subr.mxu0 0.0
        %434 = vmatpush1.msra.mxu0 0.0
        %435 = vmatprep.subr.mxu0 0.0
        %436 = vmatpush1.msra.mxu0 0.0
        %437 = vmatprep.subr.mxu0 0.0
        %438 = vmatpush1.msra.mxu0 0.0
        %439 = vmatprep.subr.mxu0 %v362
        %440 = vmatpush1.msra.mxu0 %v361
        %441 = vmatprep.subr.mxu0 %v360
        %442 = vmatpush1.msra.mxu0 %v359
        %443 = vmatprep.subr.mxu0 0.0
        %444 = vmatpush2.msra.mxu0 0.0
        %445 = vmatprep.subr.mxu0 0.0
        %446 = vmatpush2.msra.mxu0 0.0
        %447 = vmatprep.subr.mxu0 0.0
        %448 = vmatpush2.msra.mxu0 0.0
        %449 = vmatprep.subr.mxu0 0.0
        %450 = vmatpush2.msra.mxu0 0.0
        %451 = vmatprep.subr.mxu0 0.0
        %452 = vmatpush2.msra.mxu0 0.0
        %453 = vmatprep.subr.mxu0 0.0
        %454 = vmatpush2.msra.mxu0 0.0
        %455 = vmatprep.subr.mxu0 0.0
        %456 = vmatpush2.msra.mxu0 0.0
        %457 = vmatprep.subr.mxu0 0.0
        %458 = vmatpush2.msra.mxu0 0.0
        %459 = vmatprep.subr.mxu0 0.0
        %460 = vmatpush2.msra.mxu0 0.0
        %461 = vmatprep.subr.mxu0 0.0
        %462 = vmatpush2.msra.mxu0 0.0
        %463 = vmatprep.subr.mxu0 0.0
        %464 = vmatpush2.msra.mxu0 0.0
        %465 = vmatprep.subr.mxu0 0.0
        %466 = vmatpush2.msra.mxu0 0.0
        %467 = vmatprep.subr.mxu0 0.0
        %468 = vmatpush2.msra.mxu0 0.0
        %469 = vmatprep.subr.mxu0 0.0
        %470 = vmatpush2.msra.mxu0 0.0
        %471 = vmatprep.subr.mxu0 0.0
        %472 = vmatpush2.msra.mxu0 0.0
        %473 = vmatprep.subr.mxu0 0.0
        %474 = vmatpush2.msra.mxu0 0.0
        %475 = vmatprep.mubr.f32.mxu0 0.0
        %476 = vmatmul.mubr.f32.gmra.mxu0 %v388
        %v477 = vpop.f32.mrf.mxu0
        %v478 = vadd.f32 %v379, %v477
        %v479 = vpop.f32.mrf.mxu0
        %v480 = vadd.f32 %v383, %v479
        %481 = vmatprep.mubr.f32.mxu0 0.0
        %482 = vmatmul.mubr.f32.gmra.mxu0 %v391
        %v483 = vpop.f32.mrf.mxu0
        %v484 = vadd.f32 %v379, %v483
        %v485 = vpop.f32.mrf.mxu0
        %v486 = vadd.f32 %v383, %v485
        %487 = vmatprep.mubr.f32.mxu0 0.0
        %488 = vmatmul.mubr.f32.gmra.mxu0 %v394
        %v489 = vpop.f32.mrf.mxu0
        %v490 = vadd.f32 %v379, %v489
        %v491 = vpop.f32.mrf.mxu0
        %v492 = vadd.f32 %v383, %v491
        %493 = vmatprep.mubr.f32.mxu0 0.0
        %494 = vmatmul.mubr.f32.gmra.mxu0 %v397
        %v495 = vpop.f32.mrf.mxu0
        %v496 = vadd.f32 %v379, %v495
        %v497 = vpop.f32.mrf.mxu0
        %v498 = vadd.f32 %v383, %v497
        %499 = vmatprep.mubr.f32.mxu0 0.0
        %500 = vmatmul.mubr.f32.gmra.mxu0 %v400
        %v501 = vpop.f32.mrf.mxu0
        %v502 = vadd.f32 %v379, %v501
        %v503 = vpop.f32.mrf.mxu0
        %v504 = vadd.f32 %v383, %v503
        %505 = vmatprep.mubr.f32.mxu0 0.0
        %506 = vmatmul.mubr.f32.gmra.mxu0 %v403
        %v507 = vpop.f32.mrf.mxu0
        %v508 = vadd.f32 %v379, %v507
        %v509 = vpop.f32.mrf.mxu0
        %v510 = vadd.f32 %v383, %v509
        %511 = vmatprep.mubr.f32.mxu0 0.0
        %512 = vmatmul.mubr.f32.gmra.mxu0 %v406
        %v513 = vpop.f32.mrf.mxu0
        %v514 = vadd.f32 %v379, %v513
        %v515 = vpop.f32.mrf.mxu0
        %v516 = vadd.f32 %v383, %v515
        %517 = vmatprep.mubr.f32.mxu0 0.0
        %518 = vmatmul.mubr.f32.gmra.mxu0 %v409
        %v519 = vpop.f32.mrf.mxu0
        %v520 = vadd.f32 %v379, %v519
        %v521 = vpop.f32.mrf.mxu0
        %v522 = vadd.f32 %v383, %v521
        %523 = vdwg.mxu0
        %v525 = vlaneseq
        %v526 = vshrl.u32 %v525, 7
        %v527 = vsub.s32 0, %v526
        %v528 = vrot.slane %v374, %v527
        %530 = vmatprep.subr.mxu0 0.0
        %531 = vmatpush1.msra.mxu0 0.0
        %532 = vmatprep.subr.mxu0 0.0
        %533 = vmatpush1.msra.mxu0 0.0
        %534 = vmatprep.subr.mxu0 0.0
        %535 = vmatpush1.msra.mxu0 0.0
        %536 = vmatprep.subr.mxu0 0.0
        %537 = vmatpush1.msra.mxu0 0.0
        %538 = vmatprep.subr.mxu0 0.0
        %539 = vmatpush1.msra.mxu0 0.0
        %540 = vmatprep.subr.mxu0 0.0
        %541 = vmatpush1.msra.mxu0 0.0
        %542 = vmatprep.subr.mxu0 0.0
        %543 = vmatpush1.msra.mxu0 0.0
        %544 = vmatprep.subr.mxu0 0.0
        %545 = vmatpush1.msra.mxu0 0.0
        %546 = vmatprep.subr.mxu0 0.0
        %547 = vmatpush1.msra.mxu0 0.0
        %548 = vmatprep.subr.mxu0 0.0
        %549 = vmatpush1.msra.mxu0 0.0
        %550 = vmatprep.subr.mxu0 0.0
        %551 = vmatpush1.msra.mxu0 0.0
        %552 = vmatprep.subr.mxu0 0.0
        %553 = vmatpush1.msra.mxu0 0.0
        %554 = vmatprep.subr.mxu0 0.0
        %555 = vmatpush1.msra.mxu0 0.0
        %556 = vmatprep.subr.mxu0 0.0
        %557 = vmatpush1.msra.mxu0 0.0
        %558 = vmatprep.subr.mxu0 0.0
        %559 = vmatpush1.msra.mxu0 %v372
        %560 = vmatprep.subr.mxu0 0.0
        %561 = vmatpush1.msra.mxu0 %v371
        %562 = vmatprep.subr.mxu0 0.0
        %563 = vmatpush2.msra.mxu0 0.0
        %564 = vmatprep.subr.mxu0 0.0
        %565 = vmatpush2.msra.mxu0 0.0
        %566 = vmatprep.subr.mxu0 0.0
        %567 = vmatpush2.msra.mxu0 0.0
        %568 = vmatprep.subr.mxu0 0.0
        %569 = vmatpush2.msra.mxu0 0.0
        %570 = vmatprep.subr.mxu0 0.0
        %571 = vmatpush2.msra.mxu0 0.0
        %572 = vmatprep.subr.mxu0 0.0
        %573 = vmatpush2.msra.mxu0 0.0
        %574 = vmatprep.subr.mxu0 0.0
        %575 = vmatpush2.msra.mxu0 0.0
        %576 = vmatprep.subr.mxu0 0.0
        %577 = vmatpush2.msra.mxu0 0.0
        %578 = vmatprep.subr.mxu0 0.0
        %579 = vmatpush2.msra.mxu0 0.0
        %580 = vmatprep.subr.mxu0 0.0
        %581 = vmatpush2.msra.mxu0 0.0
        %582 = vmatprep.subr.mxu0 0.0
        %583 = vmatpush2.msra.mxu0 0.0
        %584 = vmatprep.subr.mxu0 0.0
        %585 = vmatpush2.msra.mxu0 0.0
        %586 = vmatprep.subr.mxu0 0.0
        %587 = vmatpush2.msra.mxu0 0.0
        %588 = vmatprep.subr.mxu0 0.0
        %589 = vmatpush2.msra.mxu0 0.0
        %590 = vmatprep.subr.mxu0 0.0
        %591 = vmatpush2.msra.mxu0 0.0
        %592 = vmatprep.subr.mxu0 0.0
        %593 = vmatpush2.msra.mxu0 0.0
        %594 = vmatprep.mubr.f32.mxu0 0.0
        %595 = vmatmul.mubr.f32.gmra.mxu0 %v388
        %v596 = vpop.f32.mrf.mxu0
        %v597 = vadd.f32 %v528, %v596
        %v598 = vpop.f32.mrf.mxu0
        %599 = vmatprep.mubr.f32.mxu0 0.0
        %600 = vmatmul.mubr.f32.gmra.mxu0 %v391
        %v601 = vpop.f32.mrf.mxu0
        %v602 = vadd.f32 %v528, %v601
        %v603 = vpop.f32.mrf.mxu0
        %604 = vmatprep.mubr.f32.mxu0 0.0
        %605 = vmatmul.mubr.f32.gmra.mxu0 %v394
        %v606 = vpop.f32.mrf.mxu0
        %v607 = vadd.f32 %v528, %v606
        %v608 = vpop.f32.mrf.mxu0
        %609 = vmatprep.mubr.f32.mxu0 0.0
        %610 = vmatmul.mubr.f32.gmra.mxu0 %v397
        %v611 = vpop.f32.mrf.mxu0
        %v612 = vadd.f32 %v528, %v611
        %v613 = vpop.f32.mrf.mxu0
        %614 = vmatprep.mubr.f32.mxu0 0.0
        %615 = vmatmul.mubr.f32.gmra.mxu0 %v400
        %v616 = vpop.f32.mrf.mxu0
        %v617 = vadd.f32 %v528, %v616
        %v618 = vpop.f32.mrf.mxu0
        %619 = vmatprep.mubr.f32.mxu0 0.0
        %620 = vmatmul.mubr.f32.gmra.mxu0 %v403
        %v621 = vpop.f32.mrf.mxu0
        %v622 = vadd.f32 %v528, %v621
        %v623 = vpop.f32.mrf.mxu0
        %624 = vmatprep.mubr.f32.mxu0 0.0
        %625 = vmatmul.mubr.f32.gmra.mxu0 %v406
        %v626 = vpop.f32.mrf.mxu0
        %v627 = vadd.f32 %v528, %v626
        %v628 = vpop.f32.mrf.mxu0
        %629 = vmatprep.mubr.f32.mxu0 0.0
        %630 = vmatmul.mubr.f32.gmra.mxu0 %v409
        %v631 = vpop.f32.mrf.mxu0
        %v632 = vadd.f32 %v528, %v631
        %v633 = vpop.f32.mrf.mxu0
        %634 = vdwg.mxu0
        %vm635 = vcmask 261120
        %v637 = vsel %vm635, 0.0, 0
        %639 = vmatprep.subr.mxu0 0.0
        %640 = vmatpush1.msra.mxu0 0.0
        %641 = vmatprep.subr.mxu0 0.0
        %642 = vmatpush1.msra.mxu0 0.0
        %643 = vmatprep.subr.mxu0 0.0
        %644 = vmatpush1.msra.mxu0 0.0
        %645 = vmatprep.subr.mxu0 0.0
        %646 = vmatpush1.msra.mxu0 0.0
        %647 = vmatprep.subr.mxu0 0.0
        %648 = vmatpush1.msra.mxu0 0.0
        %649 = vmatprep.subr.mxu0 0.0
        %650 = vmatpush1.msra.mxu0 0.0
        %651 = vmatprep.subr.mxu0 0.0
        %652 = vmatpush1.msra.mxu0 0.0
        %653 = vmatprep.subr.mxu0 0.0
        %654 = vmatpush1.msra.mxu0 0.0
        %655 = vmatprep.subr.mxu0 0.0
        %656 = vmatpush1.msra.mxu0 0.0
        %657 = vmatprep.subr.mxu0 0.0
        %658 = vmatpush1.msra.mxu0 0.0
        %659 = vmatprep.subr.mxu0 0.0
        %660 = vmatpush1.msra.mxu0 0.0
        %661 = vmatprep.subr.mxu0 0.0
        %662 = vmatpush1.msra.mxu0 0.0
        %663 = vmatprep.subr.mxu0 %v370
        %664 = vmatpush1.msra.mxu0 %v369
        %665 = vmatprep.subr.mxu0 %v368
        %666 = vmatpush1.msra.mxu0 %v367
        %667 = vmatprep.subr.mxu0 %v366
        %668 = vmatpush1.msra.mxu0 %v365
        %669 = vmatprep.subr.mxu0 %v364
        %670 = vmatpush1.msra.mxu0 %v363
        %671 = vmatprep.subr.mxu0 0.0
        %672 = vmatpush2.msra.mxu0 0.0
        %673 = vmatprep.subr.mxu0 0.0
        %674 = vmatpush2.msra.mxu0 0.0
        %675 = vmatprep.subr.mxu0 0.0
        %676 = vmatpush2.msra.mxu0 0.0
        %677 = vmatprep.subr.mxu0 0.0
        %678 = vmatpush2.msra.mxu0 0.0
        %679 = vmatprep.subr.mxu0 0.0
        %680 = vmatpush2.msra.mxu0 0.0
        %681 = vmatprep.subr.mxu0 0.0
        %682 = vmatpush2.msra.mxu0 0.0
        %683 = vmatprep.subr.mxu0 0.0
        %684 = vmatpush2.msra.mxu0 0.0
        %685 = vmatprep.subr.mxu0 0.0
        %686 = vmatpush2.msra.mxu0 0.0
        %687 = vmatprep.subr.mxu0 0.0
        %688 = vmatpush2.msra.mxu0 0.0
        %689 = vmatprep.subr.mxu0 0.0
        %690 = vmatpush2.msra.mxu0 0.0
        %691 = vmatprep.subr.mxu0 0.0
        %692 = vmatpush2.msra.mxu0 0.0
        %693 = vmatprep.subr.mxu0 0.0
        %694 = vmatpush2.msra.mxu0 0.0
        %695 = vmatprep.subr.mxu0 0.0
        %696 = vmatpush2.msra.mxu0 0.0
        %697 = vmatprep.subr.mxu0 0.0
        %698 = vmatpush2.msra.mxu0 0.0
        %699 = vmatprep.subr.mxu0 0.0
        %700 = vmatpush2.msra.mxu0 0.0
        %701 = vmatprep.subr.mxu0 0.0
        %702 = vmatpush2.msra.mxu0 0.0
        %703 = vmatprep.mubr.f32.mxu0 0.0
        %704 = vmatmul.mubr.f32.gmra.mxu0 %v637
        %v705 = vpop.f32.mrf.mxu0
        %v706 = vadd.f32 0.0, %v705
        %v707 = vpop.f32.mrf.mxu0
        %v708 = vadd.f32 0.0, %v707
        %709 = vdwg.mxu0
        %v710 = vadd.f32 %v478, %v706
        %v711 = vadd.f32 %v480, %v708
        %v712 = vxor.u32 %v710, 2147483648
        %v713 = vmul.f32 %v712, 1.442695
        %v714 = vpow.pop %v713
        %v715 = vadd.f32 %v714, 1.0
        %v716 = vrcp.pop %v715
        %v717 = vmul.f32 1.0, %v716
        %v718 = vtanh.pop %v711
        %v719 = vmul.f32 %v717, %v718
        %v720 = vmul.f32 %v717, 0.0
        %722 = vrot.lane.b32.xlu0 %v720, 64
        %v723 = vpop.permute.xlu0 %722
        %v725 = vadd.f32 %v719, %v723
        %v726 = vtanh.pop %v725
        %728 = vrot.lane.b32.xlu0 %v726, 32
        %v729 = vpop.permute.xlu0 %728
        %v731 = vmul.f32 %v717, %v729
        %733 = vrot.lane.b32.xlu0 %v731, 64
        %v734 = vpop.permute.xlu0 %733
        %v736 = vmul.f32 %v717, %v734
        %v737 = vsub.f32 1.0, %v717
        %739 = vrot.lane.b32.xlu0 %v597, 96
        %v740 = vpop.permute.xlu0 %739
        %v742 = vmul.f32 %v737, %v740
        %v743 = vadd.f32 %v736, %v742
        %745 = vrot.lane.b32.xlu0 %v743, 32
        %v746 = vpop.permute.xlu0 %745
        %v747 = vsel %vm635, %v746, 0
        %749 = vmatprep.subr.mxu0 0.0
        %750 = vmatpush1.msra.mxu0 0.0
        %751 = vmatprep.subr.mxu0 0.0
        %752 = vmatpush1.msra.mxu0 0.0
        %753 = vmatprep.subr.mxu0 0.0
        %754 = vmatpush1.msra.mxu0 0.0
        %755 = vmatprep.subr.mxu0 0.0
        %756 = vmatpush1.msra.mxu0 0.0
        %757 = vmatprep.subr.mxu0 0.0
        %758 = vmatpush1.msra.mxu0 0.0
        %759 = vmatprep.subr.mxu0 0.0
        %760 = vmatpush1.msra.mxu0 0.0
        %761 = vmatprep.subr.mxu0 0.0
        %762 = vmatpush1.msra.mxu0 0.0
        %763 = vmatprep.subr.mxu0 0.0
        %764 = vmatpush1.msra.mxu0 0.0
        %765 = vmatprep.subr.mxu0 0.0
        %766 = vmatpush1.msra.mxu0 0.0
        %767 = vmatprep.subr.mxu0 0.0
        %768 = vmatpush1.msra.mxu0 0.0
        %769 = vmatprep.subr.mxu0 0.0
        %770 = vmatpush1.msra.mxu0 0.0
        %771 = vmatprep.subr.mxu0 0.0
        %772 = vmatpush1.msra.mxu0 0.0
        %773 = vmatprep.subr.mxu0 %v370
        %774 = vmatpush1.msra.mxu0 %v369
        %775 = vmatprep.subr.mxu0 %v368
        %776 = vmatpush1.msra.mxu0 %v367
        %777 = vmatprep.subr.mxu0 %v366
        %778 = vmatpush1.msra.mxu0 %v365
        %779 = vmatprep.subr.mxu0 %v364
        %780 = vmatpush1.msra.mxu0 %v363
        %781 = vmatprep.subr.mxu0 0.0
        %782 = vmatpush2.msra.mxu0 0.0
        %783 = vmatprep.subr.mxu0 0.0
        %784 = vmatpush2.msra.mxu0 0.0
        %785 = vmatprep.subr.mxu0 0.0
        %786 = vmatpush2.msra.mxu0 0.0
        %787 = vmatprep.subr.mxu0 0.0
        %788 = vmatpush2.msra.mxu0 0.0
        %789 = vmatprep.subr.mxu0 0.0
        %790 = vmatpush2.msra.mxu0 0.0
        %791 = vmatprep.subr.mxu0 0.0
        %792 = vmatpush2.msra.mxu0 0.0
        %793 = vmatprep.subr.mxu0 0.0
        %794 = vmatpush2.msra.mxu0 0.0
        %795 = vmatprep.subr.mxu0 0.0
        %796 = vmatpush2.msra.mxu0 0.0
        %797 = vmatprep.subr.mxu0 0.0
        %798 = vmatpush2.msra.mxu0 0.0
        %799 = vmatprep.subr.mxu0 0.0
        %800 = vmatpush2.msra.mxu0 0.0
        %801 = vmatprep.subr.mxu0 0.0
        %802 = vmatpush2.msra.mxu0 0.0
        %803 = vmatprep.subr.mxu0 0.0
        %804 = vmatpush2.msra.mxu0 0.0
        %805 = vmatprep.subr.mxu0 0.0
        %806 = vmatpush2.msra.mxu0 0.0
        %807 = vmatprep.subr.mxu0 0.0
        %808 = vmatpush2.msra.mxu0 0.0
        %809 = vmatprep.subr.mxu0 0.0
        %810 = vmatpush2.msra.mxu0 0.0
        %811 = vmatprep.subr.mxu0 0.0
        %812 = vmatpush2.msra.mxu0 0.0
        %813 = vmatprep.mubr.f32.mxu0 0.0
        %814 = vmatmul.mubr.f32.gmra.mxu0 %v747
        %v815 = vpop.f32.mrf.mxu0
        %v816 = vadd.f32 0.0, %v815
        %v817 = vpop.f32.mrf.mxu0
        %v818 = vadd.f32 0.0, %v817
        %819 = vdwg.mxu0
        %v820 = vadd.f32 %v484, %v816
        %v821 = vadd.f32 %v486, %v818
        %v822 = vxor.u32 %v820, 2147483648
        %v823 = vmul.f32 %v822, 1.442695
        %v824 = vpow.pop %v823
        %v825 = vadd.f32 %v824, 1.0
        %v826 = vrcp.pop %v825
        %v827 = vmul.f32 1.0, %v826
        %v828 = vtanh.pop %v821
        %v829 = vmul.f32 %v827, %v828
        %831 = vrot.lane.b32.xlu0 %v725, 64
        %v832 = vpop.permute.xlu0 %831
        %v834 = vmul.f32 %v827, %v832
        %836 = vrot.lane.b32.xlu0 %v834, 64
        %v837 = vpop.permute.xlu0 %836
        %v839 = vadd.f32 %v829, %v837
        %v840 = vtanh.pop %v839
        %842 = vrot.lane.b32.xlu0 %v840, 32
        %v843 = vpop.permute.xlu0 %842
        %v845 = vmul.f32 %v827, %v843
        %847 = vrot.lane.b32.xlu0 %v845, 64
        %v848 = vpop.permute.xlu0 %847
        %v850 = vmul.f32 %v827, %v848
        %v851 = vsub.f32 1.0, %v827
        %853 = vrot.lane.b32.xlu0 %v602, 96
        %v854 = vpop.permute.xlu0 %853
        %v856 = vmul.f32 %v851, %v854
        %v857 = vadd.f32 %v850, %v856
        %859 = vrot.lane.b32.xlu0 %v857, 32
        %v860 = vpop.permute.xlu0 %859
        %v861 = vsel %vm635, %v860, 0
        %863 = vmatprep.subr.mxu0 0.0
        %864 = vmatpush1.msra.mxu0 0.0
        %865 = vmatprep.subr.mxu0 0.0
        %866 = vmatpush1.msra.mxu0 0.0
        %867 = vmatprep.subr.mxu0 0.0
        %868 = vmatpush1.msra.mxu0 0.0
        %869 = vmatprep.subr.mxu0 0.0
        %870 = vmatpush1.msra.mxu0 0.0
        %871 = vmatprep.subr.mxu0 0.0
        %872 = vmatpush1.msra.mxu0 0.0
        %873 = vmatprep.subr.mxu0 0.0
        %874 = vmatpush1.msra.mxu0 0.0
        %875 = vmatprep.subr.mxu0 0.0
        %876 = vmatpush1.msra.mxu0 0.0
        %877 = vmatprep.subr.mxu0 0.0
        %878 = vmatpush1.msra.mxu0 0.0
        %879 = vmatprep.subr.mxu0 0.0
        %880 = vmatpush1.msra.mxu0 0.0
        %881 = vmatprep.subr.mxu0 0.0
        %882 = vmatpush1.msra.mxu0 0.0
        %883 = vmatprep.subr.mxu0 0.0
        %884 = vmatpush1.msra.mxu0 0.0
        %885 = vmatprep.subr.mxu0 0.0
        %886 = vmatpush1.msra.mxu0 0.0
        %887 = vmatprep.subr.mxu0 %v370
        %888 = vmatpush1.msra.mxu0 %v369
        %889 = vmatprep.subr.mxu0 %v368
        %890 = vmatpush1.msra.mxu0 %v367
        %891 = vmatprep.subr.mxu0 %v366
        %892 = vmatpush1.msra.mxu0 %v365
        %893 = vmatprep.subr.mxu0 %v364
        %894 = vmatpush1.msra.mxu0 %v363
        %895 = vmatprep.subr.mxu0 0.0
        %896 = vmatpush2.msra.mxu0 0.0
        %897 = vmatprep.subr.mxu0 0.0
        %898 = vmatpush2.msra.mxu0 0.0
        %899 = vmatprep.subr.mxu0 0.0
        %900 = vmatpush2.msra.mxu0 0.0
        %901 = vmatprep.subr.mxu0 0.0
        %902 = vmatpush2.msra.mxu0 0.0
        %903 = vmatprep.subr.mxu0 0.0
        %904 = vmatpush2.msra.mxu0 0.0
        %905 = vmatprep.subr.mxu0 0.0
        %906 = vmatpush2.msra.mxu0 0.0
        %907 = vmatprep.subr.mxu0 0.0
        %908 = vmatpush2.msra.mxu0 0.0
        %909 = vmatprep.subr.mxu0 0.0
        %910 = vmatpush2.msra.mxu0 0.0
        %911 = vmatprep.subr.mxu0 0.0
        %912 = vmatpush2.msra.mxu0 0.0
        %913 = vmatprep.subr.mxu0 0.0
        %914 = vmatpush2.msra.mxu0 0.0
        %915 = vmatprep.subr.mxu0 0.0
        %916 = vmatpush2.msra.mxu0 0.0
        %917 = vmatprep.subr.mxu0 0.0
        %918 = vmatpush2.msra.mxu0 0.0
        %919 = vmatprep.subr.mxu0 0.0
        %920 = vmatpush2.msra.mxu0 0.0
        %921 = vmatprep.subr.mxu0 0.0
        %922 = vmatpush2.msra.mxu0 0.0
        %923 = vmatprep.subr.mxu0 0.0
        %924 = vmatpush2.msra.mxu0 0.0
        %925 = vmatprep.subr.mxu0 0.0
        %926 = vmatpush2.msra.mxu0 0.0
        %927 = vmatprep.mubr.f32.mxu0 0.0
        %928 = vmatmul.mubr.f32.gmra.mxu0 %v861
        %v929 = vpop.f32.mrf.mxu0
        %v930 = vadd.f32 0.0, %v929
        %v931 = vpop.f32.mrf.mxu0
        %v932 = vadd.f32 0.0, %v931
        %933 = vdwg.mxu0
        %v934 = vadd.f32 %v490, %v930
        %v935 = vadd.f32 %v492, %v932
        %v936 = vxor.u32 %v934, 2147483648
        %v937 = vmul.f32 %v936, 1.442695
        %v938 = vpow.pop %v937
        %v939 = vadd.f32 %v938, 1.0
        %v940 = vrcp.pop %v939
        %v941 = vmul.f32 1.0, %v940
        %v942 = vtanh.pop %v935
        %v943 = vmul.f32 %v941, %v942
        %945 = vrot.lane.b32.xlu0 %v839, 64
        %v946 = vpop.permute.xlu0 %945
        %v948 = vmul.f32 %v941, %v946
        %950 = vrot.lane.b32.xlu0 %v948, 64
        %v951 = vpop.permute.xlu0 %950
        %v953 = vadd.f32 %v943, %v951
        %v954 = vtanh.pop %v953
        %956 = vrot.lane.b32.xlu0 %v954, 32
        %v957 = vpop.permute.xlu0 %956
        %v959 = vmul.f32 %v941, %v957
        %961 = vrot.lane.b32.xlu0 %v959, 64
        %v962 = vpop.permute.xlu0 %961
        %v964 = vmul.f32 %v941, %v962
        %v965 = vsub.f32 1.0, %v941
        %967 = vrot.lane.b32.xlu0 %v607, 96
        %v968 = vpop.permute.xlu0 %967
        %v970 = vmul.f32 %v965, %v968
        %v971 = vadd.f32 %v964, %v970
        %973 = vrot.lane.b32.xlu0 %v971, 32
        %v974 = vpop.permute.xlu0 %973
        %v975 = vsel %vm635, %v974, 0
        %977 = vmatprep.subr.mxu0 0.0
        %978 = vmatpush1.msra.mxu0 0.0
        %979 = vmatprep.subr.mxu0 0.0
        %980 = vmatpush1.msra.mxu0 0.0
        %981 = vmatprep.subr.mxu0 0.0
        %982 = vmatpush1.msra.mxu0 0.0
        %983 = vmatprep.subr.mxu0 0.0
        %984 = vmatpush1.msra.mxu0 0.0
        %985 = vmatprep.subr.mxu0 0.0
        %986 = vmatpush1.msra.mxu0 0.0
        %987 = vmatprep.subr.mxu0 0.0
        %988 = vmatpush1.msra.mxu0 0.0
        %989 = vmatprep.subr.mxu0 0.0
        %990 = vmatpush1.msra.mxu0 0.0
        %991 = vmatprep.subr.mxu0 0.0
        %992 = vmatpush1.msra.mxu0 0.0
        %993 = vmatprep.subr.mxu0 0.0
        %994 = vmatpush1.msra.mxu0 0.0
        %995 = vmatprep.subr.mxu0 0.0
        %996 = vmatpush1.msra.mxu0 0.0
        %997 = vmatprep.subr.mxu0 0.0
        %998 = vmatpush1.msra.mxu0 0.0
        %999 = vmatprep.subr.mxu0 0.0
        %1000 = vmatpush1.msra.mxu0 0.0
        %1001 = vmatprep.subr.mxu0 %v370
        %1002 = vmatpush1.msra.mxu0 %v369
        %1003 = vmatprep.subr.mxu0 %v368
        %1004 = vmatpush1.msra.mxu0 %v367
        %1005 = vmatprep.subr.mxu0 %v366
        %1006 = vmatpush1.msra.mxu0 %v365
        %1007 = vmatprep.subr.mxu0 %v364
        %1008 = vmatpush1.msra.mxu0 %v363
        %1009 = vmatprep.subr.mxu0 0.0
        %1010 = vmatpush2.msra.mxu0 0.0
        %1011 = vmatprep.subr.mxu0 0.0
        %1012 = vmatpush2.msra.mxu0 0.0
        %1013 = vmatprep.subr.mxu0 0.0
        %1014 = vmatpush2.msra.mxu0 0.0
        %1015 = vmatprep.subr.mxu0 0.0
        %1016 = vmatpush2.msra.mxu0 0.0
        %1017 = vmatprep.subr.mxu0 0.0
        %1018 = vmatpush2.msra.mxu0 0.0
        %1019 = vmatprep.subr.mxu0 0.0
        %1020 = vmatpush2.msra.mxu0 0.0
        %1021 = vmatprep.subr.mxu0 0.0
        %1022 = vmatpush2.msra.mxu0 0.0
        %1023 = vmatprep.subr.mxu0 0.0
        %1024 = vmatpush2.msra.mxu0 0.0
        %1025 = vmatprep.subr.mxu0 0.0
        %1026 = vmatpush2.msra.mxu0 0.0
        %1027 = vmatprep.subr.mxu0 0.0
        %1028 = vmatpush2.msra.mxu0 0.0
        %1029 = vmatprep.subr.mxu0 0.0
        %1030 = vmatpush2.msra.mxu0 0.0
        %1031 = vmatprep.subr.mxu0 0.0
        %1032 = vmatpush2.msra.mxu0 0.0
        %1033 = vmatprep.subr.mxu0 0.0
        %1034 = vmatpush2.msra.mxu0 0.0
        %1035 = vmatprep.subr.mxu0 0.0
        %1036 = vmatpush2.msra.mxu0 0.0
        %1037 = vmatprep.subr.mxu0 0.0
        %1038 = vmatpush2.msra.mxu0 0.0
        %1039 = vmatprep.subr.mxu0 0.0
        %1040 = vmatpush2.msra.mxu0 0.0
        %1041 = vmatprep.mubr.f32.mxu0 0.0
        %1042 = vmatmul.mubr.f32.gmra.mxu0 %v975
        %v1043 = vpop.f32.mrf.mxu0
        %v1044 = vadd.f32 0.0, %v1043
        %v1045 = vpop.f32.mrf.mxu0
        %v1046 = vadd.f32 0.0, %v1045
        %1047 = vdwg.mxu0
        %v1048 = vadd.f32 %v496, %v1044
        %v1049 = vadd.f32 %v498, %v1046
        %v1050 = vxor.u32 %v1048, 2147483648
        %v1051 = vmul.f32 %v1050, 1.442695
        %v1052 = vpow.pop %v1051
        %v1053 = vadd.f32 %v1052, 1.0
        %v1054 = vrcp.pop %v1053
        %v1055 = vmul.f32 1.0, %v1054
        %v1056 = vtanh.pop %v1049
        %v1057 = vmul.f32 %v1055, %v1056
        %1059 = vrot.lane.b32.xlu0 %v953, 64
        %v1060 = vpop.permute.xlu0 %1059
        %v1062 = vmul.f32 %v1055, %v1060
        %1064 = vrot.lane.b32.xlu0 %v1062, 64
        %v1065 = vpop.permute.xlu0 %1064
        %v1067 = vadd.f32 %v1057, %v1065
        %v1068 = vtanh.pop %v1067
        %1070 = vrot.lane.b32.xlu0 %v1068, 32
        %v1071 = vpop.permute.xlu0 %1070
        %v1073 = vmul.f32 %v1055, %v1071
        %1075 = vrot.lane.b32.xlu0 %v1073, 64
        %v1076 = vpop.permute.xlu0 %1075
        %v1078 = vmul.f32 %v1055, %v1076
        %v1079 = vsub.f32 1.0, %v1055
        %1081 = vrot.lane.b32.xlu0 %v612, 96
        %v1082 = vpop.permute.xlu0 %1081
        %v1084 = vmul.f32 %v1079, %v1082
        %v1085 = vadd.f32 %v1078, %v1084
        %1087 = vrot.lane.b32.xlu0 %v1085, 32
        %v1088 = vpop.permute.xlu0 %1087
        %v1089 = vsel %vm635, %v1088, 0
        %1091 = vmatprep.subr.mxu0 0.0
        %1092 = vmatpush1.msra.mxu0 0.0
        %1093 = vmatprep.subr.mxu0 0.0
        %1094 = vmatpush1.msra.mxu0 0.0
        %1095 = vmatprep.subr.mxu0 0.0
        %1096 = vmatpush1.msra.mxu0 0.0
        %1097 = vmatprep.subr.mxu0 0.0
        %1098 = vmatpush1.msra.mxu0 0.0
        %1099 = vmatprep.subr.mxu0 0.0
        %1100 = vmatpush1.msra.mxu0 0.0
        %1101 = vmatprep.subr.mxu0 0.0
        %1102 = vmatpush1.msra.mxu0 0.0
        %1103 = vmatprep.subr.mxu0 0.0
        %1104 = vmatpush1.msra.mxu0 0.0
        %1105 = vmatprep.subr.mxu0 0.0
        %1106 = vmatpush1.msra.mxu0 0.0
        %1107 = vmatprep.subr.mxu0 0.0
        %1108 = vmatpush1.msra.mxu0 0.0
        %1109 = vmatprep.subr.mxu0 0.0
        %1110 = vmatpush1.msra.mxu0 0.0
        %1111 = vmatprep.subr.mxu0 0.0
        %1112 = vmatpush1.msra.mxu0 0.0
        %1113 = vmatprep.subr.mxu0 0.0
        %1114 = vmatpush1.msra.mxu0 0.0
        %1115 = vmatprep.subr.mxu0 %v370
        %1116 = vmatpush1.msra.mxu0 %v369
        %1117 = vmatprep.subr.mxu0 %v368
        %1118 = vmatpush1.msra.mxu0 %v367
        %1119 = vmatprep.subr.mxu0 %v366
        %1120 = vmatpush1.msra.mxu0 %v365
        %1121 = vmatprep.subr.mxu0 %v364
        %1122 = vmatpush1.msra.mxu0 %v363
        %1123 = vmatprep.subr.mxu0 0.0
        %1124 = vmatpush2.msra.mxu0 0.0
        %1125 = vmatprep.subr.mxu0 0.0
        %1126 = vmatpush2.msra.mxu0 0.0
        %1127 = vmatprep.subr.mxu0 0.0
        %1128 = vmatpush2.msra.mxu0 0.0
        %1129 = vmatprep.subr.mxu0 0.0
        %1130 = vmatpush2.msra.mxu0 0.0
        %1131 = vmatprep.subr.mxu0 0.0
        %1132 = vmatpush2.msra.mxu0 0.0
        %1133 = vmatprep.subr.mxu0 0.0
        %1134 = vmatpush2.msra.mxu0 0.0
        %1135 = vmatprep.subr.mxu0 0.0
        %1136 = vmatpush2.msra.mxu0 0.0
        %1137 = vmatprep.subr.mxu0 0.0
        %1138 = vmatpush2.msra.mxu0 0.0
        %1139 = vmatprep.subr.mxu0 0.0
        %1140 = vmatpush2.msra.mxu0 0.0
        %1141 = vmatprep.subr.mxu0 0.0
        %1142 = vmatpush2.msra.mxu0 0.0
        %1143 = vmatprep.subr.mxu0 0.0
        %1144 = vmatpush2.msra.mxu0 0.0
        %1145 = vmatprep.subr.mxu0 0.0
        %1146 = vmatpush2.msra.mxu0 0.0
        %1147 = vmatprep.subr.mxu0 0.0
        %1148 = vmatpush2.msra.mxu0 0.0
        %1149 = vmatprep.subr.mxu0 0.0
        %1150 = vmatpush2.msra.mxu0 0.0
        %1151 = vmatprep.subr.mxu0 0.0
        %1152 = vmatpush2.msra.mxu0 0.0
        %1153 = vmatprep.subr.mxu0 0.0
        %1154 = vmatpush2.msra.mxu0 0.0
        %1155 = vmatprep.mubr.f32.mxu0 0.0
        %1156 = vmatmul.mubr.f32.gmra.mxu0 %v1089
        %v1157 = vpop.f32.mrf.mxu0
        %v1158 = vadd.f32 0.0, %v1157
        %v1159 = vpop.f32.mrf.mxu0
        %v1160 = vadd.f32 0.0, %v1159
        %1161 = vdwg.mxu0
        %v1162 = vadd.f32 %v502, %v1158
        %v1163 = vadd.f32 %v504, %v1160
        %v1164 = vxor.u32 %v1162, 2147483648
        %v1165 = vmul.f32 %v1164, 1.442695
        %v1166 = vpow.pop %v1165
        %v1167 = vadd.f32 %v1166, 1.0
        %v1168 = vrcp.pop %v1167
        %v1169 = vmul.f32 1.0, %v1168
        %v1170 = vtanh.pop %v1163
        %v1171 = vmul.f32 %v1169, %v1170
        %1173 = vrot.lane.b32.xlu0 %v1067, 64
        %v1174 = vpop.permute.xlu0 %1173
        %v1176 = vmul.f32 %v1169, %v1174
        %1178 = vrot.lane.b32.xlu0 %v1176, 64
        %v1179 = vpop.permute.xlu0 %1178
        %v1181 = vadd.f32 %v1171, %v1179
        %v1182 = vtanh.pop %v1181
        %1184 = vrot.lane.b32.xlu0 %v1182, 32
        %v1185 = vpop.permute.xlu0 %1184
        %v1187 = vmul.f32 %v1169, %v1185
        %1189 = vrot.lane.b32.xlu0 %v1187, 64
        %v1190 = vpop.permute.xlu0 %1189
        %v1192 = vmul.f32 %v1169, %v1190
        %v1193 = vsub.f32 1.0, %v1169
        %1195 = vrot.lane.b32.xlu0 %v617, 96
        %v1196 = vpop.permute.xlu0 %1195
        %v1198 = vmul.f32 %v1193, %v1196
        %v1199 = vadd.f32 %v1192, %v1198
        %1201 = vrot.lane.b32.xlu0 %v1199, 32
        %v1202 = vpop.permute.xlu0 %1201
        %v1203 = vsel %vm635, %v1202, 0
        %1205 = vmatprep.subr.mxu0 0.0
        %1206 = vmatpush1.msra.mxu0 0.0
        %1207 = vmatprep.subr.mxu0 0.0
        %1208 = vmatpush1.msra.mxu0 0.0
        %1209 = vmatprep.subr.mxu0 0.0
        %1210 = vmatpush1.msra.mxu0 0.0
        %1211 = vmatprep.subr.mxu0 0.0
        %1212 = vmatpush1.msra.mxu0 0.0
        %1213 = vmatprep.subr.mxu0 0.0
        %1214 = vmatpush1.msra.mxu0 0.0
        %1215 = vmatprep.subr.mxu0 0.0
        %1216 = vmatpush1.msra.mxu0 0.0
        %1217 = vmatprep.subr.mxu0 0.0
        %1218 = vmatpush1.msra.mxu0 0.0
        %1219 = vmatprep.subr.mxu0 0.0
        %1220 = vmatpush1.msra.mxu0 0.0
        %1221 = vmatprep.subr.mxu0 0.0
        %1222 = vmatpush1.msra.mxu0 0.0
        %1223 = vmatprep.subr.mxu0 0.0
        %1224 = vmatpush1.msra.mxu0 0.0
        %1225 = vmatprep.subr.mxu0 0.0
        %1226 = vmatpush1.msra.mxu0 0.0
        %1227 = vmatprep.subr.mxu0 0.0
        %1228 = vmatpush1.msra.mxu0 0.0
        %1229 = vmatprep.subr.mxu0 %v370
        %1230 = vmatpush1.msra.mxu0 %v369
        %1231 = vmatprep.subr.mxu0 %v368
        %1232 = vmatpush1.msra.mxu0 %v367
        %1233 = vmatprep.subr.mxu0 %v366
        %1234 = vmatpush1.msra.mxu0 %v365
        %1235 = vmatprep.subr.mxu0 %v364
        %1236 = vmatpush1.msra.mxu0 %v363
        %1237 = vmatprep.subr.mxu0 0.0
        %1238 = vmatpush2.msra.mxu0 0.0
        %1239 = vmatprep.subr.mxu0 0.0
        %1240 = vmatpush2.msra.mxu0 0.0
        %1241 = vmatprep.subr.mxu0 0.0
        %1242 = vmatpush2.msra.mxu0 0.0
        %1243 = vmatprep.subr.mxu0 0.0
        %1244 = vmatpush2.msra.mxu0 0.0
        %1245 = vmatprep.subr.mxu0 0.0
        %1246 = vmatpush2.msra.mxu0 0.0
        %1247 = vmatprep.subr.mxu0 0.0
        %1248 = vmatpush2.msra.mxu0 0.0
        %1249 = vmatprep.subr.mxu0 0.0
        %1250 = vmatpush2.msra.mxu0 0.0
        %1251 = vmatprep.subr.mxu0 0.0
        %1252 = vmatpush2.msra.mxu0 0.0
        %1253 = vmatprep.subr.mxu0 0.0
        %1254 = vmatpush2.msra.mxu0 0.0
        %1255 = vmatprep.subr.mxu0 0.0
        %1256 = vmatpush2.msra.mxu0 0.0
        %1257 = vmatprep.subr.mxu0 0.0
        %1258 = vmatpush2.msra.mxu0 0.0
        %1259 = vmatprep.subr.mxu0 0.0
        %1260 = vmatpush2.msra.mxu0 0.0
        %1261 = vmatprep.subr.mxu0 0.0
        %1262 = vmatpush2.msra.mxu0 0.0
        %1263 = vmatprep.subr.mxu0 0.0
        %1264 = vmatpush2.msra.mxu0 0.0
        %1265 = vmatprep.subr.mxu0 0.0
        %1266 = vmatpush2.msra.mxu0 0.0
        %1267 = vmatprep.subr.mxu0 0.0
        %1268 = vmatpush2.msra.mxu0 0.0
        %1269 = vmatprep.mubr.f32.mxu0 0.0
        %1270 = vmatmul.mubr.f32.gmra.mxu0 %v1203
        %v1271 = vpop.f32.mrf.mxu0
        %v1272 = vadd.f32 0.0, %v1271
        %v1273 = vpop.f32.mrf.mxu0
        %v1274 = vadd.f32 0.0, %v1273
        %1275 = vdwg.mxu0
        %v1276 = vadd.f32 %v508, %v1272
        %v1277 = vadd.f32 %v510, %v1274
        %v1278 = vxor.u32 %v1276, 2147483648
        %v1279 = vmul.f32 %v1278, 1.442695
        %v1280 = vpow.pop %v1279
        %v1281 = vadd.f32 %v1280, 1.0
        %v1282 = vrcp.pop %v1281
        %v1283 = vmul.f32 1.0, %v1282
        %v1284 = vtanh.pop %v1277
        %v1285 = vmul.f32 %v1283, %v1284
        %1287 = vrot.lane.b32.xlu0 %v1181, 64
        %v1288 = vpop.permute.xlu0 %1287
        %v1290 = vmul.f32 %v1283, %v1288
        %1292 = vrot.lane.b32.xlu0 %v1290, 64
        %v1293 = vpop.permute.xlu0 %1292
        %v1295 = vadd.f32 %v1285, %v1293
        %v1296 = vtanh.pop %v1295
        %1298 = vrot.lane.b32.xlu0 %v1296, 32
        %v1299 = vpop.permute.xlu0 %1298
        %v1301 = vmul.f32 %v1283, %v1299
        %1303 = vrot.lane.b32.xlu0 %v1301, 64
        %v1304 = vpop.permute.xlu0 %1303
        %v1306 = vmul.f32 %v1283, %v1304
        %v1307 = vsub.f32 1.0, %v1283
        %1309 = vrot.lane.b32.xlu0 %v622, 96
        %v1310 = vpop.permute.xlu0 %1309
        %v1312 = vmul.f32 %v1307, %v1310
        %v1313 = vadd.f32 %v1306, %v1312
        %1315 = vrot.lane.b32.xlu0 %v1313, 32
        %v1316 = vpop.permute.xlu0 %1315
        %v1317 = vsel %vm635, %v1316, 0
        %1319 = vmatprep.subr.mxu0 0.0
        %1320 = vmatpush1.msra.mxu0 0.0
        %1321 = vmatprep.subr.mxu0 0.0
        %1322 = vmatpush1.msra.mxu0 0.0
        %1323 = vmatprep.subr.mxu0 0.0
        %1324 = vmatpush1.msra.mxu0 0.0
        %1325 = vmatprep.subr.mxu0 0.0
        %1326 = vmatpush1.msra.mxu0 0.0
        %1327 = vmatprep.subr.mxu0 0.0
        %1328 = vmatpush1.msra.mxu0 0.0
        %1329 = vmatprep.subr.mxu0 0.0
        %1330 = vmatpush1.msra.mxu0 0.0
        %1331 = vmatprep.subr.mxu0 0.0
        %1332 = vmatpush1.msra.mxu0 0.0
        %1333 = vmatprep.subr.mxu0 0.0
        %1334 = vmatpush1.msra.mxu0 0.0
        %1335 = vmatprep.subr.mxu0 0.0
        %1336 = vmatpush1.msra.mxu0 0.0
        %1337 = vmatprep.subr.mxu0 0.0
        %1338 = vmatpush1.msra.mxu0 0.0
        %1339 = vmatprep.subr.mxu0 0.0
        %1340 = vmatpush1.msra.mxu0 0.0
        %1341 = vmatprep.subr.mxu0 0.0
        %1342 = vmatpush1.msra.mxu0 0.0
        %1343 = vmatprep.subr.mxu0 %v370
        %1344 = vmatpush1.msra.mxu0 %v369
        %1345 = vmatprep.subr.mxu0 %v368
        %1346 = vmatpush1.msra.mxu0 %v367
        %1347 = vmatprep.subr.mxu0 %v366
        %1348 = vmatpush1.msra.mxu0 %v365
        %1349 = vmatprep.subr.mxu0 %v364
        %1350 = vmatpush1.msra.mxu0 %v363
        %1351 = vmatprep.subr.mxu0 0.0
        %1352 = vmatpush2.msra.mxu0 0.0
        %1353 = vmatprep.subr.mxu0 0.0
        %1354 = vmatpush2.msra.mxu0 0.0
        %1355 = vmatprep.subr.mxu0 0.0
        %1356 = vmatpush2.msra.mxu0 0.0
        %1357 = vmatprep.subr.mxu0 0.0
        %1358 = vmatpush2.msra.mxu0 0.0
        %1359 = vmatprep.subr.mxu0 0.0
        %1360 = vmatpush2.msra.mxu0 0.0
        %1361 = vmatprep.subr.mxu0 0.0
        %1362 = vmatpush2.msra.mxu0 0.0
        %1363 = vmatprep.subr.mxu0 0.0
        %1364 = vmatpush2.msra.mxu0 0.0
        %1365 = vmatprep.subr.mxu0 0.0
        %1366 = vmatpush2.msra.mxu0 0.0
        %1367 = vmatprep.subr.mxu0 0.0
        %1368 = vmatpush2.msra.mxu0 0.0
        %1369 = vmatprep.subr.mxu0 0.0
        %1370 = vmatpush2.msra.mxu0 0.0
        %1371 = vmatprep.subr.mxu0 0.0
        %1372 = vmatpush2.msra.mxu0 0.0
        %1373 = vmatprep.subr.mxu0 0.0
        %1374 = vmatpush2.msra.mxu0 0.0
        %1375 = vmatprep.subr.mxu0 0.0
        %1376 = vmatpush2.msra.mxu0 0.0
        %1377 = vmatprep.subr.mxu0 0.0
        %1378 = vmatpush2.msra.mxu0 0.0
        %1379 = vmatprep.subr.mxu0 0.0
        %1380 = vmatpush2.msra.mxu0 0.0
        %1381 = vmatprep.subr.mxu0 0.0
        %1382 = vmatpush2.msra.mxu0 0.0
        %1383 = vmatprep.mubr.f32.mxu0 0.0
        %1384 = vmatmul.mubr.f32.gmra.mxu0 %v1317
        %v1385 = vpop.f32.mrf.mxu0
        %v1386 = vadd.f32 0.0, %v1385
        %v1387 = vpop.f32.mrf.mxu0
        %v1388 = vadd.f32 0.0, %v1387
        %1389 = vdwg.mxu0
        %v1390 = vadd.f32 %v514, %v1386
        %v1391 = vadd.f32 %v516, %v1388
        %v1392 = vxor.u32 %v1390, 2147483648
        %v1393 = vmul.f32 %v1392, 1.442695
        %v1394 = vpow.pop %v1393
        %v1395 = vadd.f32 %v1394, 1.0
        %v1396 = vrcp.pop %v1395
        %v1397 = vmul.f32 1.0, %v1396
        %v1398 = vtanh.pop %v1391
        %v1399 = vmul.f32 %v1397, %v1398
        %1401 = vrot.lane.b32.xlu0 %v1295, 64
        %v1402 = vpop.permute.xlu0 %1401
        %v1404 = vmul.f32 %v1397, %v1402
        %1406 = vrot.lane.b32.xlu0 %v1404, 64
        %v1407 = vpop.permute.xlu0 %1406
        %v1409 = vadd.f32 %v1399, %v1407
        %v1410 = vtanh.pop %v1409
        %1412 = vrot.lane.b32.xlu0 %v1410, 32
        %v1413 = vpop.permute.xlu0 %1412
        %v1415 = vmul.f32 %v1397, %v1413
        %1417 = vrot.lane.b32.xlu0 %v1415, 64
        %v1418 = vpop.permute.xlu0 %1417
        %v1420 = vmul.f32 %v1397, %v1418
        %v1421 = vsub.f32 1.0, %v1397
        %1423 = vrot.lane.b32.xlu0 %v627, 96
        %v1424 = vpop.permute.xlu0 %1423
        %v1426 = vmul.f32 %v1421, %v1424
        %v1427 = vadd.f32 %v1420, %v1426
        %1429 = vrot.lane.b32.xlu0 %v1427, 32
        %v1430 = vpop.permute.xlu0 %1429
        %v1431 = vsel %vm635, %v1430, 0
        %1433 = vmatprep.subr.mxu0 0.0
        %1434 = vmatpush1.msra.mxu0 0.0
        %1435 = vmatprep.subr.mxu0 0.0
        %1436 = vmatpush1.msra.mxu0 0.0
        %1437 = vmatprep.subr.mxu0 0.0
        %1438 = vmatpush1.msra.mxu0 0.0
        %1439 = vmatprep.subr.mxu0 0.0
        %1440 = vmatpush1.msra.mxu0 0.0
        %1441 = vmatprep.subr.mxu0 0.0
        %1442 = vmatpush1.msra.mxu0 0.0
        %1443 = vmatprep.subr.mxu0 0.0
        %1444 = vmatpush1.msra.mxu0 0.0
        %1445 = vmatprep.subr.mxu0 0.0
        %1446 = vmatpush1.msra.mxu0 0.0
        %1447 = vmatprep.subr.mxu0 0.0
        %1448 = vmatpush1.msra.mxu0 0.0
        %1449 = vmatprep.subr.mxu0 0.0
        %1450 = vmatpush1.msra.mxu0 0.0
        %1451 = vmatprep.subr.mxu0 0.0
        %1452 = vmatpush1.msra.mxu0 0.0
        %1453 = vmatprep.subr.mxu0 0.0
        %1454 = vmatpush1.msra.mxu0 0.0
        %1455 = vmatprep.subr.mxu0 0.0
        %1456 = vmatpush1.msra.mxu0 0.0
        %1457 = vmatprep.subr.mxu0 %v370
        %1458 = vmatpush1.msra.mxu0 %v369
        %1459 = vmatprep.subr.mxu0 %v368
        %1460 = vmatpush1.msra.mxu0 %v367
        %1461 = vmatprep.subr.mxu0 %v366
        %1462 = vmatpush1.msra.mxu0 %v365
        %1463 = vmatprep.subr.mxu0 %v364
        %1464 = vmatpush1.msra.mxu0 %v363
        %1465 = vmatprep.subr.mxu0 0.0
        %1466 = vmatpush2.msra.mxu0 0.0
        %1467 = vmatprep.subr.mxu0 0.0
        %1468 = vmatpush2.msra.mxu0 0.0
        %1469 = vmatprep.subr.mxu0 0.0
        %1470 = vmatpush2.msra.mxu0 0.0
        %1471 = vmatprep.subr.mxu0 0.0
        %1472 = vmatpush2.msra.mxu0 0.0
        %1473 = vmatprep.subr.mxu0 0.0
        %1474 = vmatpush2.msra.mxu0 0.0
        %1475 = vmatprep.subr.mxu0 0.0
        %1476 = vmatpush2.msra.mxu0 0.0
        %1477 = vmatprep.subr.mxu0 0.0
        %1478 = vmatpush2.msra.mxu0 0.0
        %1479 = vmatprep.subr.mxu0 0.0
        %1480 = vmatpush2.msra.mxu0 0.0
        %1481 = vmatprep.subr.mxu0 0.0
        %1482 = vmatpush2.msra.mxu0 0.0
        %1483 = vmatprep.subr.mxu0 0.0
        %1484 = vmatpush2.msra.mxu0 0.0
        %1485 = vmatprep.subr.mxu0 0.0
        %1486 = vmatpush2.msra.mxu0 0.0
        %1487 = vmatprep.subr.mxu0 0.0
        %1488 = vmatpush2.msra.mxu0 0.0
        %1489 = vmatprep.subr.mxu0 0.0
        %1490 = vmatpush2.msra.mxu0 0.0
        %1491 = vmatprep.subr.mxu0 0.0
        %1492 = vmatpush2.msra.mxu0 0.0
        %1493 = vmatprep.subr.mxu0 0.0
        %1494 = vmatpush2.msra.mxu0 0.0
        %1495 = vmatprep.subr.mxu0 0.0
        %1496 = vmatpush2.msra.mxu0 0.0
        %1497 = vmatprep.mubr.f32.mxu0 0.0
        %1498 = vmatmul.mubr.f32.gmra.mxu0 %v1431
        %v1499 = vpop.f32.mrf.mxu0
        %v1500 = vadd.f32 0.0, %v1499
        %v1501 = vpop.f32.mrf.mxu0
        %v1502 = vadd.f32 0.0, %v1501
        %1503 = vdwg.mxu0
        %v1504 = vadd.f32 %v520, %v1500
        %v1505 = vadd.f32 %v522, %v1502
        %v1506 = vxor.u32 %v1504, 2147483648
        %v1507 = vmul.f32 %v1506, 1.442695
        %v1508 = vpow.pop %v1507
        %v1509 = vadd.f32 %v1508, 1.0
        %v1510 = vrcp.pop %v1509
        %v1511 = vmul.f32 1.0, %v1510
        %v1512 = vtanh.pop %v1505
        %v1513 = vmul.f32 %v1511, %v1512
        %1515 = vrot.lane.b32.xlu0 %v1409, 64
        %v1516 = vpop.permute.xlu0 %1515
        %v1518 = vmul.f32 %v1511, %v1516
        %1520 = vrot.lane.b32.xlu0 %v1518, 64
        %v1521 = vpop.permute.xlu0 %1520
        %v1523 = vadd.f32 %v1513, %v1521
        %v1524 = vtanh.pop %v1523
        %1526 = vrot.lane.b32.xlu0 %v1524, 32
        %v1527 = vpop.permute.xlu0 %1526
        %v1529 = vmul.f32 %v1511, %v1527
        %1531 = vrot.lane.b32.xlu0 %v1529, 64
        %v1532 = vpop.permute.xlu0 %1531
        %v1534 = vmul.f32 %v1511, %v1532
        %v1535 = vsub.f32 1.0, %v1511
        %1537 = vrot.lane.b32.xlu0 %v632, 96
        %v1538 = vpop.permute.xlu0 %1537
        %v1540 = vmul.f32 %v1535, %v1538
        %v1541 = vadd.f32 %v1534, %v1540
        %1543 = vrot.lane.b32.xlu0 %v857, 64
        %v1544 = vpop.permute.xlu0 %1543
        %1546 = vrot.lane.b32.xlu0 %v971, 96
        %v1547 = vpop.permute.xlu0 %1546
        %1550 = vrot.lane.b32.xlu0 %v1313, 64
        %v1551 = vpop.permute.xlu0 %1550
        %1553 = vrot.lane.b32.xlu0 %v1427, 96
        %v1554 = vpop.permute.xlu0 %1553
        %v1556 = vsel %vm635, %v746, %v1544
        %vm1557 = vcmask 523264
        %v1558 = vsel %vm1557, %v1556, %v1547
        %vm1559 = vcmask 785408
        %v1560 = vsel %vm1559, %v1558, %v1085
        %v1561 = vsel %vm635, %v1202, %v1551
        %v1562 = vsel %vm1557, %v1561, %v1554
        %v1563 = vsel %vm1559, %v1562, %v1541
        %1564 = vst [vmem:[%s343] sm:$0xff] %v1560
        %1565 = vst [vmem:[%s343 + $0x8] sm:$0xff] %v1563
        %1566 = vrot.lane.b32.xlu0 %v839, 32
        %v1567 = vpop.permute.xlu0 %1566
        %1569 = vrot.lane.b32.xlu0 %v1067, 96
        %v1570 = vpop.permute.xlu0 %1569
        %1572 = vrot.lane.b32.xlu0 %v1295, 32
        %v1573 = vpop.permute.xlu0 %1572
        %1576 = vrot.lane.b32.xlu0 %v1523, 96
        %v1577 = vpop.permute.xlu0 %1576
        %v1579 = vsel %vm635, %v725, %v1567
        %v1580 = vsel %vm1557, %v1579, %v1060
        %v1581 = vsel %vm1559, %v1580, %v1570
        %v1582 = vsel %vm635, %v1181, %v1573
        %v1583 = vsel %vm1557, %v1582, %v1516
        %v1584 = vsel %vm1559, %v1583, %v1577
        %1585 = vst [vmem:[%s350] sm:$0xff] %v1581
        %1586 = vst [vmem:[%s350 + $0x8] sm:$0xff] %v1584
        %s1587 = sand.u32 %s164, 1
        %s1588 = scalar_lea.sflag [#allocation4], %s1587
        %s1589 = sand.u32 %s164, 1
        %s1590 = smul.addr %s1589, 16
        %s1591 = scalar_lea.vmem [#allocation3], %s1590
        %s1592 = sand.u32 %s190, 1
        %s1593 = scalar_lea.sflag [#allocation6], %s1592
        %s1594 = sand.u32 %s190, 1
        %s1595 = smul.addr %s1594, 16
        %s1596 = scalar_lea.vmem [#allocation5], %s1595
        // Predicated region
        $region83: #{tpu_custom_call.1} parent=77 // pred_check
          %p1597 = pneg %p174
        $region84: #{tpu_custom_call.1} parent=77 // pred_check_branch
          %1599 = sbr.rel (%p1597) target = $region86
        $region85: #{tpu_custom_call.1} parent=77 // pred_region
          %s1601 = ssub.s32 256, 256
          %1602 = vsyncadd %s1588, %s1601
          %s1603 = smul.addr %s25, 2
          %s1604 = smul.addr %s1603, 128
          %s1605 = scalar_lea.hbm %s6, %s1604
          %s1607 = sshll.u32 %s1591, 4
          %s1608 = int_to_ptr.vmem [resolvable:$true] %s1607
          %1610 = dma.vmem_to_hbm [thread:$0]  %s1608, 256, %s1605, %s1588
        $region86: #{tpu_custom_call.1} parent=77 // pred_fallthru
          _
        // Predicated region
        $region87: #{tpu_custom_call.1} parent=77 // pred_check
          %p1611 = pneg %p200
        $region88: #{tpu_custom_call.1} parent=77 // pred_check_branch
          %1613 = sbr.rel (%p1611) target = $region90
        $region89: #{tpu_custom_call.1} parent=77 // pred_region
          %s1615 = ssub.s32 256, 256
          %1616 = vsyncadd %s1593, %s1615
          %s1617 = smul.addr %s25, 2
          %s1618 = smul.addr %s1617, 128
          %s1619 = scalar_lea.hbm %s7, %s1618
          %s1621 = sshll.u32 %s1596, 4
          %s1622 = int_to_ptr.vmem [resolvable:$true] %s1621
          %1624 = dma.vmem_to_hbm [thread:$0]  %s1622, 256, %s1619, %s1593
        $region90: #{tpu_custom_call.1} parent=77 // pred_fallthru
          _
      $region78: #{tpu_custom_call.1} parent=5 // pred_fallthru
        _
      %p1625 = scmp.le.s32.totalorder 2, %s20
      // Predicated region
      $region91: #{tpu_custom_call.1} parent=5 // pred_check
        %p1626 = pneg %p1625
      $region92: #{tpu_custom_call.1} parent=5 // pred_check_branch
        %1628 = sbr.rel (%p1626) target = $region94
      $region93: #{tpu_custom_call.1} parent=5 // pred_region
        %s1629 = ssub.s32 %s20, 2
        // Predicated region
        $region95: #{tpu_custom_call.1} parent=93 // pred_check
          %p1630 = pneg %p180
        $region96: #{tpu_custom_call.1} parent=93 // pred_check_branch
          %1632 = sbr.rel (%p1630) target = $region98
        $region97: #{tpu_custom_call.1} parent=93 // pred_region
          %s1633 = sand.u32 %s165, 1
          %s1634 = scalar_lea.sflag [#allocation4], %s1633
          %s1635 = sand.u32 %s165, 1
          %s1636 = smul.addr %s1635, 16
          %s1637 = scalar_lea.vmem [#allocation3], %s1636
          %1638 = dma.done %s1634, 256
        $region98: #{tpu_custom_call.1} parent=93 // pred_fallthru
          _
        // Predicated region
        $region99: #{tpu_custom_call.1} parent=93 // pred_check
          %p1639 = pneg %p206
        $region100: #{tpu_custom_call.1} parent=93 // pred_check_branch
          %1641 = sbr.rel (%p1639) target = $region102
        $region101: #{tpu_custom_call.1} parent=93 // pred_region
          %s1642 = sand.u32 %s191, 1
          %s1643 = scalar_lea.sflag [#allocation6], %s1642
          %s1644 = sand.u32 %s191, 1
          %s1645 = smul.addr %s1644, 16
          %s1646 = scalar_lea.vmem [#allocation5], %s1645
          %1647 = dma.done %s1643, 256
        $region102: #{tpu_custom_call.1} parent=93 // pred_fallthru
          _
      $region94: #{tpu_custom_call.1} parent=5 // pred_fallthru
        _
    $region6: #{tpu_custom_call.1} parent=1 // loop_footer
      %s24 = sadd.s32 1, %s20
    $region7: #{tpu_custom_call.1} parent=1 // loop_footer_branch
      %19 = sbr.rel target = $region3
    $region8: #{tpu_custom_call.1} parent=1 // loop_exit
      _
    %1648 = vsyncpa [#allocation4], 1
    %s1649 = scalar_lea.sflag [#allocation4], 1
    %1650 = vsyncpa %s1649, 1
    %1651 = vsyncpa [#allocation6], 1
    %s1652 = scalar_lea.sflag [#allocation6], 1
    %1653 = vsyncpa %s1652, 1

</llo_original>
